<compile_context>
chip_gen: v7x
topology: tpu7x:2x2x1
jax: 0.10.0
libtpu: 0.0.40
codegen_flags: <defaults>
</compile_context>

<pallas_src>
import math

import jax
import jax.numpy as jnp
from jax.experimental import pallas as pl
from jax.experimental.pallas import tpu as pltpu

EMBED_SIZE = 32
NUM_HEADS = 4
HEAD_DIM = EMBED_SIZE // NUM_HEADS
BATCH = 2
SEQ = 8


def gated_attention_kernel(x_ref, w_ref, b_ref, o_ref):
    """Single invocation (no grid); everything is VMEM-resident.

    x_ref : (3, B*S, E)  row-stacked q / k / v activations
    w_ref : (5, E, E)    wq, wk, wv, wg, wo   (x @ W convention, lane-dense)
    b_ref : (5, 1, E)    bq, bk, bv, bg, bo
    o_ref : (B*S, E)
    """
    _, BS, E = x_ref.shape
    H = NUM_HEADS
    Dh = E // H
    S = SEQ
    B = BS // S
    scale = 1.0 / math.sqrt(Dh)

    # --- Q/K/V projections: three row-stacked (B*S, E) @ (E, E) MXU matmuls. ---
    qf = jnp.dot(x_ref[0], w_ref[0], preferred_element_type=jnp.float32) + b_ref[0]
    kf = jnp.dot(x_ref[1], w_ref[1], preferred_element_type=jnp.float32) + b_ref[1]
    vf = jnp.dot(x_ref[2], w_ref[2], preferred_element_type=jnp.float32) + b_ref[2]

    def split_heads(x2d):
        # (B*S, E) -> (H*B, S, Dh) with batch index n = h*B + b.
        # Uses only static lane slices + a tile-aligned sublane split; no general
        # transpose is emitted.
        xh = jnp.stack([x2d[:, h * Dh:(h + 1) * Dh] for h in range(H)], axis=0)
        return xh.reshape(H * B, S, Dh)

    qh = split_heads(qf)
    kh = split_heads(kf)
    vh = split_heads(vf)

    # --- Scaled dot-product attention, one trace batched over all B*H groups. ---
    scores = jnp.einsum("nqd,nkd->nqk", qh, kh,
                        preferred_element_type=jnp.float32) * scale
    scores = scores - jnp.max(scores, axis=-1, keepdims=True)
    p = jnp.exp(scores)
    attn = p / jnp.sum(p, axis=-1, keepdims=True)
    oh = jnp.einsum("nqk,nkd->nqd", attn, vh,
                    preferred_element_type=jnp.float32)          # (H*B, S, Dh)

    # --- Merge heads back to (B*S, E): one lane-concat relayout. ---
    oh4 = oh.reshape(H, B, S, Dh)
    merged = jnp.concatenate([oh4[h] for h in range(H)], axis=-1)  # (B, S, E)
    attn_out = merged.reshape(BS, E)

    # --- Gate + output projections over all B*S rows at once. ---
    gate = jax.nn.sigmoid(
        jnp.dot(attn_out, w_ref[3], preferred_element_type=jnp.float32) + b_ref[3])
    gated = attn_out * gate
    out = jnp.dot(gated, w_ref[4], preferred_element_type=jnp.float32) + b_ref[4]
    o_ref[...] = out.astype(o_ref.dtype)


def _pack_inputs(q, k, v, params):
    """Wrapper-side packing: 3 lane-dense slabs instead of 10+ small arrays."""
    B, S, E = q.shape
    x = jnp.stack([q.reshape(B * S, E),
                   k.reshape(B * S, E),
                   v.reshape(B * S, E)], axis=0)                     # (3, B*S, E)
    w = jnp.stack([params["wq"], params["wk"], params["wv"],
                   params["wg"], params["wo"]], axis=0)              # (5, E, E)
    b = jnp.stack([params["bq"], params["bk"], params["bv"],
                   params["bg"], params["bo"]], axis=0)              # (5, 1, E)
    return x, w, b


def gated_attention(q, k, v, params):
    """q, k, v: [B, S, E] float32.  params: dict of (E, E) weights, (1, E) biases."""
    B, S, E = q.shape
    x, w, b = _pack_inputs(q, k, v, params)

    vmem = pltpu.MemorySpace.VMEM
    out_flat = pl.pallas_call(
        gated_attention_kernel,
        out_shape=jax.ShapeDtypeStruct((B * S, E), q.dtype),
        in_specs=[
            pl.BlockSpec(memory_space=vmem),
            pl.BlockSpec(memory_space=vmem),
            pl.BlockSpec(memory_space=vmem),
        ],
        out_specs=pl.BlockSpec(memory_space=vmem),
    )(x, w, b)
    return out_flat.reshape(B, S, E)


def reference_forward(q, k, v, params):
    """Pure-JAX reference mirroring the PyTorch module."""
    B, S, E = q.shape
    H, Dh = NUM_HEADS, HEAD_DIM

    def lin(x, w, b):
        return x @ w + b

    Q = lin(q, params["wq"], params["bq"]).reshape(B, S, H, Dh).transpose(0, 2, 1, 3)
    K = lin(k, params["wk"], params["bk"]).reshape(B, S, H, Dh).transpose(0, 2, 1, 3)
    V = lin(v, params["wv"], params["bv"]).reshape(B, S, H, Dh).transpose(0, 2, 1, 3)
    scores = jnp.einsum("bhqd,bhkd->bhqk", Q, K) / math.sqrt(Dh)
    attn = jax.nn.softmax(scores, axis=-1)
    out = jnp.einsum("bhqk,bhkd->bhqd", attn, V)
    out = out.transpose(0, 2, 1, 3).reshape(B, S, E)
    gate = jax.nn.sigmoid(lin(out, params["wg"], params["bg"]))
    out = out * gate
    return lin(out, params["wo"], params["bo"])


def init_params(key, embed_size):
    """Deterministic init; weights stored as [in, out] (x @ W + b convention)."""
    names = ["q", "k", "v", "g", "o"]
    keys = jax.random.split(key, 2 * len(names))
    params = {}
    bound = 1.0 / math.sqrt(embed_size)
    for i, n in enumerate(names):
        params[f"w{n}"] = jax.random.uniform(
            keys[2 * i], (embed_size, embed_size), jnp.float32, -bound, bound)
        params[f"b{n}"] = jax.random.uniform(
            keys[2 * i + 1], (1, embed_size), jnp.float32, -bound, bound)
    return params


if __name__ == "__main__":
    key = jax.random.PRNGKey(0)
    k_params, kq, kk, kv = jax.random.split(key, 4)

    params = init_params(k_params, EMBED_SIZE)
    q = jax.random.normal(kq, (BATCH, SEQ, EMBED_SIZE), jnp.float32)
    k = jax.random.normal(kk, (BATCH, SEQ, EMBED_SIZE), jnp.float32)
    v = jax.random.normal(kv, (BATCH, SEQ, EMBED_SIZE), jnp.float32)

    out = gated_attention(q, k, v, params)
    out = jax.block_until_ready(out)

    ref = jax.block_until_ready(reference_forward(q, k, v, params))
    assert out.shape == (BATCH, SEQ, EMBED_SIZE)
    assert jnp.allclose(out, ref, atol=1e-4, rtol=1e-4), "mismatch vs pure-JAX reference"

    print("KERNEL_OK")
</pallas_src>

<mosaic_0001>
module attributes {stable_mosaic.version = 11 : i64} {
  func.func @gated_attention_kernel(%arg0: memref<3x16x32xf32, #tpu.memory_space<vmem>>, %arg1: memref<5x32x32xf32, #tpu.memory_space<vmem>>, %arg2: memref<5x1x32xf32, #tpu.memory_space<vmem>>, %arg3: memref<16x32xf32, #tpu.memory_space<vmem>>) attributes {dimension_semantics = [], scalar_prefetch = 0 : i64, scratch_operands = 0 : i64, tpu.core_type = #tpu.core_type<tc>} {
    %c0 = arith.constant 0 : index
    %c0_0 = arith.constant 0 : index
    %c0_1 = arith.constant 0 : index
    %0 = vector.load %arg0[%c0, %c0_0, %c0_1] : memref<3x16x32xf32, #tpu.memory_space<vmem>>, vector<1x16x32xf32>
    %1 = vector.shape_cast %0 : vector<1x16x32xf32> to vector<16x32xf32>
    %c0_2 = arith.constant 0 : index
    %c0_3 = arith.constant 0 : index
    %c0_4 = arith.constant 0 : index
    %2 = vector.load %arg1[%c0_2, %c0_3, %c0_4] : memref<5x32x32xf32, #tpu.memory_space<vmem>>, vector<1x32x32xf32>
    %3 = vector.shape_cast %2 : vector<1x32x32xf32> to vector<32x32xf32>
    %cst = arith.constant dense<0.000000e+00> : vector<16x32xf32>
    %4 = tpu.matmul %1, %3, %cst {dimension_numbers = #tpu.dot_dimension_numbers<[1], [0], [0], [1], [0, 0, 1, 1], [], []>} : vector<16x32xf32>, vector<32x32xf32>, vector<16x32xf32> -> vector<16x32xf32>
    %c0_5 = arith.constant 0 : index
    %c0_6 = arith.constant 0 : index
    %c0_7 = arith.constant 0 : index
    %5 = vector.load %arg2[%c0_5, %c0_6, %c0_7] : memref<5x1x32xf32, #tpu.memory_space<vmem>>, vector<1x1x32xf32>
    %6 = vector.shape_cast %5 : vector<1x1x32xf32> to vector<1x32xf32>
    %7 = vector.broadcast %6 : vector<1x32xf32> to vector<16x32xf32>
    %8 = arith.addf %4, %7 : vector<16x32xf32>
    %c1 = arith.constant 1 : index
    %c0_8 = arith.constant 0 : index
    %c0_9 = arith.constant 0 : index
    %9 = vector.load %arg0[%c1, %c0_8, %c0_9] : memref<3x16x32xf32, #tpu.memory_space<vmem>>, vector<1x16x32xf32>
    %10 = vector.shape_cast %9 : vector<1x16x32xf32> to vector<16x32xf32>
    %c1_10 = arith.constant 1 : index
    %c0_11 = arith.constant 0 : index
    %c0_12 = arith.constant 0 : index
    %11 = vector.load %arg1[%c1_10, %c0_11, %c0_12] : memref<5x32x32xf32, #tpu.memory_space<vmem>>, vector<1x32x32xf32>
    %12 = vector.shape_cast %11 : vector<1x32x32xf32> to vector<32x32xf32>
    %cst_13 = arith.constant dense<0.000000e+00> : vector<16x32xf32>
    %13 = tpu.matmul %10, %12, %cst_13 {dimension_numbers = #tpu.dot_dimension_numbers<[1], [0], [0], [1], [0, 0, 1, 1], [], []>} : vector<16x32xf32>, vector<32x32xf32>, vector<16x32xf32> -> vector<16x32xf32>
    %c1_14 = arith.constant 1 : index
    %c0_15 = arith.constant 0 : index
    %c0_16 = arith.constant 0 : index
    %14 = vector.load %arg2[%c1_14, %c0_15, %c0_16] : memref<5x1x32xf32, #tpu.memory_space<vmem>>, vector<1x1x32xf32>
    %15 = vector.shape_cast %14 : vector<1x1x32xf32> to vector<1x32xf32>
    %16 = vector.broadcast %15 : vector<1x32xf32> to vector<16x32xf32>
    %17 = arith.addf %13, %16 : vector<16x32xf32>
    %c2 = arith.constant 2 : index
    %c0_17 = arith.constant 0 : index
    %c0_18 = arith.constant 0 : index
    %18 = vector.load %arg0[%c2, %c0_17, %c0_18] : memref<3x16x32xf32, #tpu.memory_space<vmem>>, vector<1x16x32xf32>
    %19 = vector.shape_cast %18 : vector<1x16x32xf32> to vector<16x32xf32>
    %c2_19 = arith.constant 2 : index
    %c0_20 = arith.constant 0 : index
    %c0_21 = arith.constant 0 : index
    %20 = vector.load %arg1[%c2_19, %c0_20, %c0_21] : memref<5x32x32xf32, #tpu.memory_space<vmem>>, vector<1x32x32xf32>
    %21 = vector.shape_cast %20 : vector<1x32x32xf32> to vector<32x32xf32>
    %cst_22 = arith.constant dense<0.000000e+00> : vector<16x32xf32>
    %22 = tpu.matmul %19, %21, %cst_22 {dimension_numbers = #tpu.dot_dimension_numbers<[1], [0], [0], [1], [0, 0, 1, 1], [], []>} : vector<16x32xf32>, vector<32x32xf32>, vector<16x32xf32> -> vector<16x32xf32>
    %c2_23 = arith.constant 2 : index
    %c0_24 = arith.constant 0 : index
    %c0_25 = arith.constant 0 : index
    %23 = vector.load %arg2[%c2_23, %c0_24, %c0_25] : memref<5x1x32xf32, #tpu.memory_space<vmem>>, vector<1x1x32xf32>
    %24 = vector.shape_cast %23 : vector<1x1x32xf32> to vector<1x32xf32>
    %25 = vector.broadcast %24 : vector<1x32xf32> to vector<16x32xf32>
    %26 = arith.addf %22, %25 : vector<16x32xf32>
    %27 = vector.extract_strided_slice %8 {offsets = [0, 0], sizes = [16, 8], strides = [1, 1]} : vector<16x32xf32> to vector<16x8xf32>
    %28 = vector.extract_strided_slice %8 {offsets = [0, 8], sizes = [16, 8], strides = [1, 1]} : vector<16x32xf32> to vector<16x8xf32>
    %29 = vector.extract_strided_slice %8 {offsets = [0, 16], sizes = [16, 8], strides = [1, 1]} : vector<16x32xf32> to vector<16x8xf32>
    %30 = vector.extract_strided_slice %8 {offsets = [0, 24], sizes = [16, 8], strides = [1, 1]} : vector<16x32xf32> to vector<16x8xf32>
    %31 = vector.shape_cast %27 : vector<16x8xf32> to vector<1x16x8xf32>
    %32 = vector.shape_cast %28 : vector<16x8xf32> to vector<1x16x8xf32>
    %33 = vector.shape_cast %29 : vector<16x8xf32> to vector<1x16x8xf32>
    %34 = vector.shape_cast %30 : vector<16x8xf32> to vector<1x16x8xf32>
    %35 = tpu.concatenate %31, %32, %33, %34 in 0 : vector<1x16x8xf32>, vector<1x16x8xf32>, vector<1x16x8xf32>, vector<1x16x8xf32> -> vector<4x16x8xf32>
    %36 = vector.shape_cast %35 : vector<4x16x8xf32> to vector<8x8x8xf32>
    %37 = vector.extract_strided_slice %17 {offsets = [0, 0], sizes = [16, 8], strides = [1, 1]} : vector<16x32xf32> to vector<16x8xf32>
    %38 = vector.extract_strided_slice %17 {offsets = [0, 8], sizes = [16, 8], strides = [1, 1]} : vector<16x32xf32> to vector<16x8xf32>
    %39 = vector.extract_strided_slice %17 {offsets = [0, 16], sizes = [16, 8], strides = [1, 1]} : vector<16x32xf32> to vector<16x8xf32>
    %40 = vector.extract_strided_slice %17 {offsets = [0, 24], sizes = [16, 8], strides = [1, 1]} : vector<16x32xf32> to vector<16x8xf32>
    %41 = vector.shape_cast %37 : vector<16x8xf32> to vector<1x16x8xf32>
    %42 = vector.shape_cast %38 : vector<16x8xf32> to vector<1x16x8xf32>
    %43 = vector.shape_cast %39 : vector<16x8xf32> to vector<1x16x8xf32>
    %44 = vector.shape_cast %40 : vector<16x8xf32> to vector<1x16x8xf32>
    %45 = tpu.concatenate %41, %42, %43, %44 in 0 : vector<1x16x8xf32>, vector<1x16x8xf32>, vector<1x16x8xf32>, vector<1x16x8xf32> -> vector<4x16x8xf32>
    %46 = vector.shape_cast %45 : vector<4x16x8xf32> to vector<8x8x8xf32>
    %47 = vector.extract_strided_slice %26 {offsets = [0, 0], sizes = [16, 8], strides = [1, 1]} : vector<16x32xf32> to vector<16x8xf32>
    %48 = vector.extract_strided_slice %26 {offsets = [0, 8], sizes = [16, 8], strides = [1, 1]} : vector<16x32xf32> to vector<16x8xf32>
    %49 = vector.extract_strided_slice %26 {offsets = [0, 16], sizes = [16, 8], strides = [1, 1]} : vector<16x32xf32> to vector<16x8xf32>
    %50 = vector.extract_strided_slice %26 {offsets = [0, 24], sizes = [16, 8], strides = [1, 1]} : vector<16x32xf32> to vector<16x8xf32>
    %51 = vector.shape_cast %47 : vector<16x8xf32> to vector<1x16x8xf32>
    %52 = vector.shape_cast %48 : vector<16x8xf32> to vector<1x16x8xf32>
    %53 = vector.shape_cast %49 : vector<16x8xf32> to vector<1x16x8xf32>
    %54 = vector.shape_cast %50 : vector<16x8xf32> to vector<1x16x8xf32>
    %55 = tpu.concatenate %51, %52, %53, %54 in 0 : vector<1x16x8xf32>, vector<1x16x8xf32>, vector<1x16x8xf32>, vector<1x16x8xf32> -> vector<4x16x8xf32>
    %56 = vector.shape_cast %55 : vector<4x16x8xf32> to vector<8x8x8xf32>
    "tpu.trace_start"() <{level = 10 : i32, message = "nqd,nkd->nqk"}> : () -> ()
    %cst_26 = arith.constant dense<0.000000e+00> : vector<8x8x8xf32>
    %57 = tpu.matmul %36, %46, %cst_26 {dimension_numbers = #tpu.dot_dimension_numbers<[2], [2], [1], [1], [0, 0, 0, 1, 1, 1], [0], [0]>} : vector<8x8x8xf32>, vector<8x8x8xf32>, vector<8x8x8xf32> -> vector<8x8x8xf32>
    "tpu.trace_stop"() : () -> ()
    %cst_27 = arith.constant 0.353553385 : f32
    %58 = vector.broadcast %cst_27 : f32 to vector<8x8x8xf32>
    %59 = arith.mulf %57, %58 : vector<8x8x8xf32>
    %cst_28 = arith.constant dense<0xFF800000> : vector<8x8xf32>
    %60 = vector.multi_reduction <maximumf>, %59, %cst_28 [2] : vector<8x8x8xf32> to vector<8x8xf32>
    %61 = vector.shape_cast %60 : vector<8x8xf32> to vector<8x8x1xf32>
    %62 = vector.broadcast %61 : vector<8x8x1xf32> to vector<8x8x8xf32>
    %63 = arith.subf %59, %62 : vector<8x8x8xf32>
    %64 = math.exp %63 : vector<8x8x8xf32>
    %cst_29 = arith.constant dense<0.000000e+00> : vector<8x8xf32>
    %65 = vector.multi_reduction <add>, %64, %cst_29 [2] : vector<8x8x8xf32> to vector<8x8xf32>
    %66 = vector.shape_cast %65 : vector<8x8xf32> to vector<8x8x1xf32>
    %67 = vector.broadcast %66 : vector<8x8x1xf32> to vector<8x8x8xf32>
    %68 = arith.divf %64, %67 : vector<8x8x8xf32>
    "tpu.trace_start"() <{level = 10 : i32, message = "nqk,nkd->nqd"}> : () -> ()
    %cst_30 = arith.constant dense<0.000000e+00> : vector<8x8x8xf32>
    %69 = tpu.matmul %68, %56, %cst_30 {dimension_numbers = #tpu.dot_dimension_numbers<[2], [1], [1], [2], [0, 0, 0, 1, 1, 2], [0], [0]>} : vector<8x8x8xf32>, vector<8x8x8xf32>, vector<8x8x8xf32> -> vector<8x8x8xf32>
    "tpu.trace_stop"() : () -> ()
    %70 = vector.shape_cast %69 : vector<8x8x8xf32> to vector<4x2x8x8xf32>
    %71 = vector.extract_strided_slice %70 {offsets = [0, 0, 0, 0], sizes = [1, 2, 8, 8], strides = [1, 1, 1, 1]} : vector<4x2x8x8xf32> to vector<1x2x8x8xf32>
    %72 = vector.shape_cast %71 : vector<1x2x8x8xf32> to vector<2x8x8xf32>
    %73 = vector.extract_strided_slice %70 {offsets = [1, 0, 0, 0], sizes = [1, 2, 8, 8], strides = [1, 1, 1, 1]} : vector<4x2x8x8xf32> to vector<1x2x8x8xf32>
    %74 = vector.shape_cast %73 : vector<1x2x8x8xf32> to vector<2x8x8xf32>
    %75 = vector.extract_strided_slice %70 {offsets = [2, 0, 0, 0], sizes = [1, 2, 8, 8], strides = [1, 1, 1, 1]} : vector<4x2x8x8xf32> to vector<1x2x8x8xf32>
    %76 = vector.shape_cast %75 : vector<1x2x8x8xf32> to vector<2x8x8xf32>
    %77 = vector.extract_strided_slice %70 {offsets = [3, 0, 0, 0], sizes = [1, 2, 8, 8], strides = [1, 1, 1, 1]} : vector<4x2x8x8xf32> to vector<1x2x8x8xf32>
    %78 = vector.shape_cast %77 : vector<1x2x8x8xf32> to vector<2x8x8xf32>
    %79 = tpu.concatenate %72, %74, %76, %78 in 2 : vector<2x8x8xf32>, vector<2x8x8xf32>, vector<2x8x8xf32>, vector<2x8x8xf32> -> vector<2x8x32xf32>
    %80 = vector.shape_cast %79 : vector<2x8x32xf32> to vector<16x32xf32>
    %c3 = arith.constant 3 : index
    %c0_31 = arith.constant 0 : index
    %c0_32 = arith.constant 0 : index
    %81 = vector.load %arg1[%c3, %c0_31, %c0_32] : memref<5x32x32xf32, #tpu.memory_space<vmem>>, vector<1x32x32xf32>
    %82 = vector.shape_cast %81 : vector<1x32x32xf32> to vector<32x32xf32>
    %cst_33 = arith.constant dense<0.000000e+00> : vector<16x32xf32>
    %83 = tpu.matmul %80, %82, %cst_33 {dimension_numbers = #tpu.dot_dimension_numbers<[1], [0], [0], [1], [0, 0, 1, 1], [], []>} : vector<16x32xf32>, vector<32x32xf32>, vector<16x32xf32> -> vector<16x32xf32>
    %c3_34 = arith.constant 3 : index
    %c0_35 = arith.constant 0 : index
    %c0_36 = arith.constant 0 : index
    %84 = vector.load %arg2[%c3_34, %c0_35, %c0_36] : memref<5x1x32xf32, #tpu.memory_space<vmem>>, vector<1x1x32xf32>
    %85 = vector.shape_cast %84 : vector<1x1x32xf32> to vector<1x32xf32>
    %86 = vector.broadcast %85 : vector<1x32xf32> to vector<16x32xf32>
    %87 = arith.addf %83, %86 : vector<16x32xf32>
    %88 = arith.negf %87 : vector<16x32xf32>
    %89 = math.exp %88 : vector<16x32xf32>
    %cst_37 = arith.constant 1.000000e+00 : f32
    %90 = vector.broadcast %cst_37 : f32 to vector<16x32xf32>
    %91 = arith.addf %90, %89 : vector<16x32xf32>
    %92 = arith.divf %90, %91 : vector<16x32xf32>
    %93 = arith.mulf %80, %92 : vector<16x32xf32>
    %c4 = arith.constant 4 : index
    %c0_38 = arith.constant 0 : index
    %c0_39 = arith.constant 0 : index
    %94 = vector.load %arg1[%c4, %c0_38, %c0_39] : memref<5x32x32xf32, #tpu.memory_space<vmem>>, vector<1x32x32xf32>
    %95 = vector.shape_cast %94 : vector<1x32x32xf32> to vector<32x32xf32>
    %cst_40 = arith.constant dense<0.000000e+00> : vector<16x32xf32>
    %96 = tpu.matmul %93, %95, %cst_40 {dimension_numbers = #tpu.dot_dimension_numbers<[1], [0], [0], [1], [0, 0, 1, 1], [], []>} : vector<16x32xf32>, vector<32x32xf32>, vector<16x32xf32> -> vector<16x32xf32>
    %c4_41 = arith.constant 4 : index
    %c0_42 = arith.constant 0 : index
    %c0_43 = arith.constant 0 : index
    %97 = vector.load %arg2[%c4_41, %c0_42, %c0_43] : memref<5x1x32xf32, #tpu.memory_space<vmem>>, vector<1x1x32xf32>
    %98 = vector.shape_cast %97 : vector<1x1x32xf32> to vector<1x32xf32>
    %99 = vector.broadcast %98 : vector<1x32xf32> to vector<16x32xf32>
    %100 = arith.addf %96, %99 : vector<16x32xf32>
    %c0_44 = arith.constant 0 : index
    %c0_45 = arith.constant 0 : index
    %101 = vector.load %arg3[%c0_44, %c0_45] : memref<16x32xf32, #tpu.memory_space<vmem>>, vector<16x32xf32>
    tpu.vector_store %arg3[%c0_44, %c0_45], %100 {strides = array<i32>} : memref<16x32xf32, #tpu.memory_space<vmem>>, vector<16x32xf32>,
    return
  }
}

</mosaic_0001>

<llo_original>
// kernel: tpu_custom_call.1
$region0: #{tpu_custom_call.1}
  #allocation0 [shape = 'u32[]', space=smem, size = 0x4, offset = 0x4, fixed_abs, tag = 'smem constant byte address 0x4 - core index']
  #allocation1 [shape = 'u32[144,128]{1,0:T(1,128)}', space=vmem, size = 0x12000, scoped, tag = 'internal scratch']
  %s0 = inlined_call_operand.hbm [shape: f32[3,16,32], index: 0, kind: input, shape index: {}]
  %s1 = inlined_call_operand.hbm [shape: f32[5,32,32], index: 1, kind: input, shape index: {}]
  %s2 = inlined_call_operand.vmem [shape: f32[5,1,32], index: 2, kind: input, shape index: {}]
  %s3 = inlined_call_operand.hbm [shape: f32[16,32], index: 3, kind: output, shape index: {}]
  %s4 = sld [smem:[#allocation0]]
  $region30: #{tpu_custom_call.1} parent=0
    _
  %s6 = ssub.s32 1, %s4
  %s7 = scalar_select 0, %s6, %s4
  $region1: #{tpu_custom_call.1} parent=0
    #allocation2 [shape = 'u8[24576]{0}', space=vmem, size = 0x6000, scoped, tag = 'input window, operand 0, single buffered']
    #allocation3 [shape = 's32[1]{0}', space=sflag, size = 0x4, scoped, tag = 'scoped memory for tpu_custom_call.1']
    #allocation4 [shape = 's32[1]{0}', space=sflag, size = 0x4, scoped, tag = 'scoped memory for tpu_custom_call.1']
    #allocation5 [shape = 'u8[81920]{0}', space=vmem, size = 0x14000, scoped, tag = 'input window, operand 1, single buffered']
    #allocation6 [shape = 's32[1]{0}', space=sflag, size = 0x4, scoped, tag = 'scoped memory for tpu_custom_call.1']
    #allocation7 [shape = 'u8[8192]{0}', space=vmem, size = 0x2000, scoped, tag = 'output window, operand 0, single buffered']
    %8 = vsyncpa [#allocation3], 0
    %9 = vsyncpa [#allocation6], 0
    %10 = vsyncpa [#allocation4], 0
    // Predicated region
    $region2: #{tpu_custom_call.1} parent=1 // pred_check
      _
    $region3: #{tpu_custom_call.1} parent=1 // pred_check_branch
      %12 = sbr.rel (0) target = $region5
    $region4: #{tpu_custom_call.1} parent=1 // pred_region
      %s14 = ssub.s32 768, 768
      %15 = vsyncadd [#allocation3], %s14
      %s16 = sshll.u32 [#allocation2], 4
      %s17 = int_to_ptr.vmem [resolvable:$true] %s16
      %22 = dma.hbm_to_vmem [thread:$0]  %s0, 768, %s17, [#allocation3], 128, 128, 8
    $region5: #{tpu_custom_call.1} parent=1 // pred_fallthru
      _
    // Predicated region
    $region6: #{tpu_custom_call.1} parent=1 // pred_check
      _
    $region7: #{tpu_custom_call.1} parent=1 // pred_check_branch
      %24 = sbr.rel (0) target = $region9
    $region8: #{tpu_custom_call.1} parent=1 // pred_region
      %s26 = ssub.s32 2560, 2560
      %27 = vsyncadd [#allocation6], %s26
      %s28 = sshll.u32 [#allocation5], 4
      %s29 = int_to_ptr.vmem [resolvable:$true] %s28
      %34 = dma.hbm_to_vmem [thread:$0]  %s1, 2560, %s29, [#allocation6], 128, 128, 8
    $region9: #{tpu_custom_call.1} parent=1 // pred_fallthru
      _
    // Predicated region
    $region10: #{tpu_custom_call.1} parent=1 // pred_check
      _
    $region11: #{tpu_custom_call.1} parent=1 // pred_check_branch
      %36 = sbr.rel (0) target = $region13
    $region12: #{tpu_custom_call.1} parent=1 // pred_region
      _
    $region13: #{tpu_custom_call.1} parent=1 // pred_fallthru
      _
    // Predicated region
    $region14: #{tpu_custom_call.1} parent=1 // pred_check
      _
    $region15: #{tpu_custom_call.1} parent=1 // pred_check_branch
      %38 = sbr.rel (0) target = $region17
    $region16: #{tpu_custom_call.1} parent=1 // pred_region
      %39 = dma.done [#allocation3], 768
    $region17: #{tpu_custom_call.1} parent=1 // pred_fallthru
      _
    // Predicated region
    $region18: #{tpu_custom_call.1} parent=1 // pred_check
      _
    $region19: #{tpu_custom_call.1} parent=1 // pred_check_branch
      %41 = sbr.rel (0) target = $region21
    $region20: #{tpu_custom_call.1} parent=1 // pred_region
      %42 = dma.done [#allocation6], 2560
    $region21: #{tpu_custom_call.1} parent=1 // pred_fallthru
      _
    %v43 = vld [vmem:[#allocation2] sm:$0xff]
    %v44 = vld [vmem:[#allocation2 + $0x8] sm:$0xff]
    %v45 = vld [vmem:[#allocation5] sm:$0xff]
    %v46 = vld [vmem:[#allocation5 + $0x8] sm:$0xff]
    %v47 = vld [vmem:[#allocation5 + $0x10] sm:$0xff]
    %v48 = vld [vmem:[#allocation5 + $0x18] sm:$0xff]
    %v49 = vld [vmem:[%s2] sm:$0x1]
    %v51 = vlaneseq
    %v52 = vshrl.u32 %v51, 7
    %v53 = vsub.s32 0, %v52
    %v54 = vrot.slane %v49, %v53
    %vm56 = vcmask 261120
    %v58 = vsel %vm56, %v43, 0
    %v61 = vsel %vm56, %v44, 0
    %63 = vmatprep.subr.mxu0 0.0
    %64 = vmatpush1.msra.mxu0 %v45
    %65 = vmatprep.subr.mxu0 0.0
    %66 = vmatpush1.msra.mxu0 %v46
    %67 = vmatprep.subr.mxu0 0.0
    %68 = vmatpush1.msra.mxu0 %v47
    %69 = vmatprep.subr.mxu0 0.0
    %70 = vmatpush1.msra.mxu0 %v48
    %71 = vmatprep.subr.mxu0 0.0
    %72 = vmatpush1.msra.mxu0 0.0
    %73 = vmatprep.subr.mxu0 0.0
    %74 = vmatpush1.msra.mxu0 0.0
    %75 = vmatprep.subr.mxu0 0.0
    %76 = vmatpush1.msra.mxu0 0.0
    %77 = vmatprep.subr.mxu0 0.0
    %78 = vmatpush1.msra.mxu0 0.0
    %79 = vmatprep.subr.mxu0 0.0
    %80 = vmatpush1.msra.mxu0 0.0
    %81 = vmatprep.subr.mxu0 0.0
    %82 = vmatpush1.msra.mxu0 0.0
    %83 = vmatprep.subr.mxu0 0.0
    %84 = vmatpush1.msra.mxu0 0.0
    %85 = vmatprep.subr.mxu0 0.0
    %86 = vmatpush1.msra.mxu0 0.0
    %87 = vmatprep.subr.mxu0 0.0
    %88 = vmatpush1.msra.mxu0 0.0
    %89 = vmatprep.subr.mxu0 0.0
    %90 = vmatpush1.msra.mxu0 0.0
    %91 = vmatprep.subr.mxu0 0.0
    %92 = vmatpush1.msra.mxu0 0.0
    %93 = vmatprep.subr.mxu0 0.0
    %94 = vmatpush1.msra.mxu0 0.0
    %95 = vmatprep.subr.mxu0 0.0
    %96 = vmatpush1.msra.mxu0 0.0
    %97 = vmatprep.subr.mxu0 0.0
    %98 = vmatpush1.msra.mxu0 0.0
    %99 = vmatprep.subr.mxu0 0.0
    %100 = vmatpush1.msra.mxu0 0.0
    %101 = vmatprep.subr.mxu0 0.0
    %102 = vmatpush1.msra.mxu0 0.0
    %103 = vmatprep.subr.mxu0 0.0
    %104 = vmatpush1.msra.mxu0 0.0
    %105 = vmatprep.subr.mxu0 0.0
    %106 = vmatpush1.msra.mxu0 0.0
    %107 = vmatprep.subr.mxu0 0.0
    %108 = vmatpush1.msra.mxu0 0.0
    %109 = vmatprep.subr.mxu0 0.0
    %110 = vmatpush1.msra.mxu0 0.0
    %111 = vmatprep.subr.mxu0 0.0
    %112 = vmatpush1.msra.mxu0 0.0
    %113 = vmatprep.subr.mxu0 0.0
    %114 = vmatpush1.msra.mxu0 0.0
    %115 = vmatprep.subr.mxu0 0.0
    %116 = vmatpush1.msra.mxu0 0.0
    %117 = vmatprep.subr.mxu0 0.0
    %118 = vmatpush1.msra.mxu0 0.0
    %119 = vmatprep.subr.mxu0 0.0
    %120 = vmatpush1.msra.mxu0 0.0
    %121 = vmatprep.subr.mxu0 0.0
    %122 = vmatpush1.msra.mxu0 0.0
    %123 = vmatprep.subr.mxu0 0.0
    %124 = vmatpush1.msra.mxu0 0.0
    %125 = vmatprep.subr.mxu0 0.0
    %126 = vmatpush1.msra.mxu0 0.0
    %127 = vmatprep.mubr.f32.mxu0 0.0
    %128 = vmatmul.mubr.f32.gmra.mrb[0].mxu0 %v58
    %v129 = vpop.f32.mrb[0].mxu0
    %v130 = vadd.f32 %v54, %v129
    %v131 = vpop.f32.mrb[0].mxu0
    %132 = vmatprep.mubr.f32.mxu0 0.0
    %133 = vmatmul.mubr.f32.gmra.mrb[0].mxu0 %v61
    %v134 = vpop.f32.mrb[0].mxu0
    %v135 = vadd.f32 %v54, %v134
    %v136 = vpop.f32.mrb[0].mxu0
    %137 = vdwg.mxu0
    %s138 = scalar_lea.vmem [#allocation2], 16
    %v139 = vld [vmem:[%s138] sm:$0xff]
    %v140 = vld [vmem:[%s138 + $0x8] sm:$0xff]
    %s141 = scalar_lea.vmem [#allocation5], 32
    %v142 = vld [vmem:[%s141] sm:$0xff]
    %v143 = vld [vmem:[%s141 + $0x8] sm:$0xff]
    %v144 = vld [vmem:[%s141 + $0x10] sm:$0xff]
    %v145 = vld [vmem:[%s141 + $0x18] sm:$0xff]
    %s146 = scalar_lea.vmem %s2, 1
    %v147 = vld [vmem:[%s146] sm:$0x1]
    %v149 = vlaneseq
    %v150 = vshrl.u32 %v149, 7
    %v151 = vsub.s32 0, %v150
    %v152 = vrot.slane %v147, %v151
    %v155 = vsel %vm56, %v139, 0
    %v158 = vsel %vm56, %v140, 0
    %160 = vmatprep.subr.mxu0 0.0
    %161 = vmatpush1.msra.mxu0 %v142
    %162 = vmatprep.subr.mxu0 0.0
    %163 = vmatpush1.msra.mxu0 %v143
    %164 = vmatprep.subr.mxu0 0.0
    %165 = vmatpush1.msra.mxu0 %v144
    %166 = vmatprep.subr.mxu0 0.0
    %167 = vmatpush1.msra.mxu0 %v145
    %168 = vmatprep.subr.mxu0 0.0
    %169 = vmatpush1.msra.mxu0 0.0
    %170 = vmatprep.subr.mxu0 0.0
    %171 = vmatpush1.msra.mxu0 0.0
    %172 = vmatprep.subr.mxu0 0.0
    %173 = vmatpush1.msra.mxu0 0.0
    %174 = vmatprep.subr.mxu0 0.0
    %175 = vmatpush1.msra.mxu0 0.0
    %176 = vmatprep.subr.mxu0 0.0
    %177 = vmatpush1.msra.mxu0 0.0
    %178 = vmatprep.subr.mxu0 0.0
    %179 = vmatpush1.msra.mxu0 0.0
    %180 = vmatprep.subr.mxu0 0.0
    %181 = vmatpush1.msra.mxu0 0.0
    %182 = vmatprep.subr.mxu0 0.0
    %183 = vmatpush1.msra.mxu0 0.0
    %184 = vmatprep.subr.mxu0 0.0
    %185 = vmatpush1.msra.mxu0 0.0
    %186 = vmatprep.subr.mxu0 0.0
    %187 = vmatpush1.msra.mxu0 0.0
    %188 = vmatprep.subr.mxu0 0.0
    %189 = vmatpush1.msra.mxu0 0.0
    %190 = vmatprep.subr.mxu0 0.0
    %191 = vmatpush1.msra.mxu0 0.0
    %192 = vmatprep.subr.mxu0 0.0
    %193 = vmatpush1.msra.mxu0 0.0
    %194 = vmatprep.subr.mxu0 0.0
    %195 = vmatpush1.msra.mxu0 0.0
    %196 = vmatprep.subr.mxu0 0.0
    %197 = vmatpush1.msra.mxu0 0.0
    %198 = vmatprep.subr.mxu0 0.0
    %199 = vmatpush1.msra.mxu0 0.0
    %200 = vmatprep.subr.mxu0 0.0
    %201 = vmatpush1.msra.mxu0 0.0
    %202 = vmatprep.subr.mxu0 0.0
    %203 = vmatpush1.msra.mxu0 0.0
    %204 = vmatprep.subr.mxu0 0.0
    %205 = vmatpush1.msra.mxu0 0.0
    %206 = vmatprep.subr.mxu0 0.0
    %207 = vmatpush1.msra.mxu0 0.0
    %208 = vmatprep.subr.mxu0 0.0
    %209 = vmatpush1.msra.mxu0 0.0
    %210 = vmatprep.subr.mxu0 0.0
    %211 = vmatpush1.msra.mxu0 0.0
    %212 = vmatprep.subr.mxu0 0.0
    %213 = vmatpush1.msra.mxu0 0.0
    %214 = vmatprep.subr.mxu0 0.0
    %215 = vmatpush1.msra.mxu0 0.0
    %216 = vmatprep.subr.mxu0 0.0
    %217 = vmatpush1.msra.mxu0 0.0
    %218 = vmatprep.subr.mxu0 0.0
    %219 = vmatpush1.msra.mxu0 0.0
    %220 = vmatprep.subr.mxu0 0.0
    %221 = vmatpush1.msra.mxu0 0.0
    %222 = vmatprep.subr.mxu0 0.0
    %223 = vmatpush1.msra.mxu0 0.0
    %224 = vmatprep.mubr.f32.mxu0 0.0
    %225 = vmatmul.mubr.f32.gmra.mrb[0].mxu0 %v155
    %v226 = vpop.f32.mrb[0].mxu0
    %v227 = vadd.f32 %v152, %v226
    %v228 = vpop.f32.mrb[0].mxu0
    %229 = vmatprep.mubr.f32.mxu0 0.0
    %230 = vmatmul.mubr.f32.gmra.mrb[0].mxu0 %v158
    %v231 = vpop.f32.mrb[0].mxu0
    %v232 = vadd.f32 %v152, %v231
    %v233 = vpop.f32.mrb[0].mxu0
    %234 = vdwg.mxu0
    %s235 = scalar_lea.vmem [#allocation2], 32
    %v236 = vld [vmem:[%s235] sm:$0xff]
    %v237 = vld [vmem:[%s235 + $0x8] sm:$0xff]
    %s238 = scalar_lea.vmem [#allocation5], 64
    %v239 = vld [vmem:[%s238] sm:$0xff]
    %v240 = vld [vmem:[%s238 + $0x8] sm:$0xff]
    %v241 = vld [vmem:[%s238 + $0x10] sm:$0xff]
    %v242 = vld [vmem:[%s238 + $0x18] sm:$0xff]
    %s243 = scalar_lea.vmem %s2, 2
    %v244 = vld [vmem:[%s243] sm:$0x1]
    %v246 = vlaneseq
    %v247 = vshrl.u32 %v246, 7
    %v248 = vsub.s32 0, %v247
    %v249 = vrot.slane %v244, %v248
    %v252 = vsel %vm56, %v236, 0
    %v255 = vsel %vm56, %v237, 0
    %257 = vmatprep.subr.mxu0 0.0
    %258 = vmatpush1.msra.mxu0 %v239
    %259 = vmatprep.subr.mxu0 0.0
    %260 = vmatpush1.msra.mxu0 %v240
    %261 = vmatprep.subr.mxu0 0.0
    %262 = vmatpush1.msra.mxu0 %v241
    %263 = vmatprep.subr.mxu0 0.0
    %264 = vmatpush1.msra.mxu0 %v242
    %265 = vmatprep.subr.mxu0 0.0
    %266 = vmatpush1.msra.mxu0 0.0
    %267 = vmatprep.subr.mxu0 0.0
    %268 = vmatpush1.msra.mxu0 0.0
    %269 = vmatprep.subr.mxu0 0.0
    %270 = vmatpush1.msra.mxu0 0.0
    %271 = vmatprep.subr.mxu0 0.0
    %272 = vmatpush1.msra.mxu0 0.0
    %273 = vmatprep.subr.mxu0 0.0
    %274 = vmatpush1.msra.mxu0 0.0
    %275 = vmatprep.subr.mxu0 0.0
    %276 = vmatpush1.msra.mxu0 0.0
    %277 = vmatprep.subr.mxu0 0.0
    %278 = vmatpush1.msra.mxu0 0.0
    %279 = vmatprep.subr.mxu0 0.0
    %280 = vmatpush1.msra.mxu0 0.0
    %281 = vmatprep.subr.mxu0 0.0
    %282 = vmatpush1.msra.mxu0 0.0
    %283 = vmatprep.subr.mxu0 0.0
    %284 = vmatpush1.msra.mxu0 0.0
    %285 = vmatprep.subr.mxu0 0.0
    %286 = vmatpush1.msra.mxu0 0.0
    %287 = vmatprep.subr.mxu0 0.0
    %288 = vmatpush1.msra.mxu0 0.0
    %289 = vmatprep.subr.mxu0 0.0
    %290 = vmatpush1.msra.mxu0 0.0
    %291 = vmatprep.subr.mxu0 0.0
    %292 = vmatpush1.msra.mxu0 0.0
    %293 = vmatprep.subr.mxu0 0.0
    %294 = vmatpush1.msra.mxu0 0.0
    %295 = vmatprep.subr.mxu0 0.0
    %296 = vmatpush1.msra.mxu0 0.0
    %297 = vmatprep.subr.mxu0 0.0
    %298 = vmatpush1.msra.mxu0 0.0
    %299 = vmatprep.subr.mxu0 0.0
    %300 = vmatpush1.msra.mxu0 0.0
    %301 = vmatprep.subr.mxu0 0.0
    %302 = vmatpush1.msra.mxu0 0.0
    %303 = vmatprep.subr.mxu0 0.0
    %304 = vmatpush1.msra.mxu0 0.0
    %305 = vmatprep.subr.mxu0 0.0
    %306 = vmatpush1.msra.mxu0 0.0
    %307 = vmatprep.subr.mxu0 0.0
    %308 = vmatpush1.msra.mxu0 0.0
    %309 = vmatprep.subr.mxu0 0.0
    %310 = vmatpush1.msra.mxu0 0.0
    %311 = vmatprep.subr.mxu0 0.0
    %312 = vmatpush1.msra.mxu0 0.0
    %313 = vmatprep.subr.mxu0 0.0
    %314 = vmatpush1.msra.mxu0 0.0
    %315 = vmatprep.subr.mxu0 0.0
    %316 = vmatpush1.msra.mxu0 0.0
    %317 = vmatprep.subr.mxu0 0.0
    %318 = vmatpush1.msra.mxu0 0.0
    %319 = vmatprep.subr.mxu0 0.0
    %320 = vmatpush1.msra.mxu0 0.0
    %321 = vmatprep.mubr.f32.mxu0 0.0
    %322 = vmatmul.mubr.f32.gmra.mrb[0].mxu0 %v252
    %v323 = vpop.f32.mrb[0].mxu0
    %v324 = vadd.f32 %v249, %v323
    %v325 = vpop.f32.mrb[0].mxu0
    %326 = vmatprep.mubr.f32.mxu0 0.0
    %327 = vmatmul.mubr.f32.gmra.mrb[0].mxu0 %v255
    %v328 = vpop.f32.mrb[0].mxu0
    %v329 = vadd.f32 %v249, %v328
    %v330 = vpop.f32.mrb[0].mxu0
    %331 = vdwg.mxu0
    %334 = vrot.lane.b32.xlu0 %v130, 120
    %v335 = vpop.permute.xlu0 %334
    %336 = vrot.lane.b32.xlu0 %v135, 120
    %v337 = vpop.permute.xlu0 %336
    %338 = vrot.lane.b32.xlu0 %v130, 112
    %v339 = vpop.permute.xlu0 %338
    %340 = vrot.lane.b32.xlu0 %v135, 112
    %v341 = vpop.permute.xlu0 %340
    %342 = vrot.lane.b32.xlu0 %v130, 104
    %v343 = vpop.permute.xlu0 %342
    %344 = vrot.lane.b32.xlu0 %v135, 104
    %v345 = vpop.permute.xlu0 %344
    %348 = vrot.lane.b32.xlu0 %v227, 120
    %v349 = vpop.permute.xlu0 %348
    %350 = vrot.lane.b32.xlu0 %v232, 120
    %v351 = vpop.permute.xlu0 %350
    %352 = vrot.lane.b32.xlu0 %v227, 112
    %v353 = vpop.permute.xlu0 %352
    %354 = vrot.lane.b32.xlu0 %v232, 112
    %v355 = vpop.permute.xlu0 %354
    %356 = vrot.lane.b32.xlu0 %v227, 104
    %v357 = vpop.permute.xlu0 %356
    %358 = vrot.lane.b32.xlu0 %v232, 104
    %v359 = vpop.permute.xlu0 %358
    %362 = vrot.lane.b32.xlu0 %v324, 120
    %v363 = vpop.permute.xlu0 %362
    %364 = vrot.lane.b32.xlu0 %v329, 120
    %v365 = vpop.permute.xlu0 %364
    %368 = vrot.lane.b32.xlu0 %v324, 112
    %v369 = vpop.permute.xlu0 %368
    %370 = vrot.lane.b32.xlu0 %v329, 112
    %v371 = vpop.permute.xlu0 %370
    %374 = vrot.lane.b32.xlu0 %v324, 104
    %v375 = vpop.permute.xlu0 %374
    %376 = vrot.lane.b32.xlu0 %v329, 104
    %v377 = vpop.permute.xlu0 %376
    %vm380 = vcmask 64512
    %v381 = vsel %vm380, %v130, 0
    %v383 = vsel %vm380, %v227, 0
    %385 = vmatprep.subr.mxu0 0.0
    %386 = vmatpush1.xpose.msra.mxu0 %v383
    %387 = vmatprep.subr.mxu0 0.0
    %388 = vmatpush1.xpose.msra.mxu0 0.0
    %389 = vmatprep.subr.mxu0 0.0
    %390 = vmatpush1.xpose.msra.mxu0 0.0
    %391 = vmatprep.subr.mxu0 0.0
    %392 = vmatpush1.xpose.msra.mxu0 0.0
    %393 = vmatprep.subr.mxu0 0.0
    %394 = vmatpush1.xpose.msra.mxu0 0.0
    %395 = vmatprep.subr.mxu0 0.0
    %396 = vmatpush1.xpose.msra.mxu0 0.0
    %397 = vmatprep.subr.mxu0 0.0
    %398 = vmatpush1.xpose.msra.mxu0 0.0
    %399 = vmatprep.subr.mxu0 0.0
    %400 = vmatpush1.xpose.msra.mxu0 0.0
    %401 = vmatprep.subr.mxu0 0.0
    %402 = vmatpush1.xpose.msra.mxu0 0.0
    %403 = vmatprep.subr.mxu0 0.0
    %404 = vmatpush1.xpose.msra.mxu0 0.0
    %405 = vmatprep.subr.mxu0 0.0
    %406 = vmatpush1.xpose.msra.mxu0 0.0
    %407 = vmatprep.subr.mxu0 0.0
    %408 = vmatpush1.xpose.msra.mxu0 0.0
    %409 = vmatprep.subr.mxu0 0.0
    %410 = vmatpush1.xpose.msra.mxu0 0.0
    %411 = vmatprep.subr.mxu0 0.0
    %412 = vmatpush1.xpose.msra.mxu0 0.0
    %413 = vmatprep.subr.mxu0 0.0
    %414 = vmatpush1.xpose.msra.mxu0 0.0
    %415 = vmatprep.subr.mxu0 0.0
    %416 = vmatpush1.xpose.msra.mxu0 0.0
    %417 = vmatprep.subr.mxu0 0.0
    %418 = vmatpush1.xpose.msra.mxu0 0.0
    %419 = vmatprep.subr.mxu0 0.0
    %420 = vmatpush1.xpose.msra.mxu0 0.0
    %421 = vmatprep.subr.mxu0 0.0
    %422 = vmatpush1.xpose.msra.mxu0 0.0
    %423 = vmatprep.subr.mxu0 0.0
    %424 = vmatpush1.xpose.msra.mxu0 0.0
    %425 = vmatprep.subr.mxu0 0.0
    %426 = vmatpush1.xpose.msra.mxu0 0.0
    %427 = vmatprep.subr.mxu0 0.0
    %428 = vmatpush1.xpose.msra.mxu0 0.0
    %429 = vmatprep.subr.mxu0 0.0
    %430 = vmatpush1.xpose.msra.mxu0 0.0
    %431 = vmatprep.subr.mxu0 0.0
    %432 = vmatpush1.xpose.msra.mxu0 0.0
    %433 = vmatprep.subr.mxu0 0.0
    %434 = vmatpush1.xpose.msra.mxu0 0.0
    %435 = vmatprep.subr.mxu0 0.0
    %436 = vmatpush1.xpose.msra.mxu0 0.0
    %437 = vmatprep.subr.mxu0 0.0
    %438 = vmatpush1.xpose.msra.mxu0 0.0
    %439 = vmatprep.subr.mxu0 0.0
    %440 = vmatpush1.xpose.msra.mxu0 0.0
    %441 = vmatprep.subr.mxu0 0.0
    %442 = vmatpush1.xpose.msra.mxu0 0.0
    %443 = vmatprep.subr.mxu0 0.0
    %444 = vmatpush1.xpose.msra.mxu0 0.0
    %445 = vmatprep.subr.mxu0 0.0
    %446 = vmatpush1.xpose.msra.mxu0 0.0
    %447 = vmatprep.subr.mxu0 0.0
    %448 = vmatpush1.xpose.msra.mxu0 0.0
    %449 = vmatprep.mubr.f32.mxu0 0.0
    %450 = vmatmul.mubr.f32.gmra.mrb[0].mxu0 %v381
    %v451 = vpop.f32.mrb[0].mxu0
    %v452 = vadd.f32 0.0, %v451
    %v453 = vpop.f32.mrb[0].mxu0
    %454 = vdwg.mxu0
    %v455 = vsel %vm380, %v135, 0
    %v457 = vsel %vm380, %v232, 0
    %459 = vmatprep.subr.mxu0 0.0
    %460 = vmatpush1.xpose.msra.mxu0 %v457
    %461 = vmatprep.subr.mxu0 0.0
    %462 = vmatpush1.xpose.msra.mxu0 0.0
    %463 = vmatprep.subr.mxu0 0.0
    %464 = vmatpush1.xpose.msra.mxu0 0.0
    %465 = vmatprep.subr.mxu0 0.0
    %466 = vmatpush1.xpose.msra.mxu0 0.0
    %467 = vmatprep.subr.mxu0 0.0
    %468 = vmatpush1.xpose.msra.mxu0 0.0
    %469 = vmatprep.subr.mxu0 0.0
    %470 = vmatpush1.xpose.msra.mxu0 0.0
    %471 = vmatprep.subr.mxu0 0.0
    %472 = vmatpush1.xpose.msra.mxu0 0.0
    %473 = vmatprep.subr.mxu0 0.0
    %474 = vmatpush1.xpose.msra.mxu0 0.0
    %475 = vmatprep.subr.mxu0 0.0
    %476 = vmatpush1.xpose.msra.mxu0 0.0
    %477 = vmatprep.subr.mxu0 0.0
    %478 = vmatpush1.xpose.msra.mxu0 0.0
    %479 = vmatprep.subr.mxu0 0.0
    %480 = vmatpush1.xpose.msra.mxu0 0.0
    %481 = vmatprep.subr.mxu0 0.0
    %482 = vmatpush1.xpose.msra.mxu0 0.0
    %483 = vmatprep.subr.mxu0 0.0
    %484 = vmatpush1.xpose.msra.mxu0 0.0
    %485 = vmatprep.subr.mxu0 0.0
    %486 = vmatpush1.xpose.msra.mxu0 0.0
    %487 = vmatprep.subr.mxu0 0.0
    %488 = vmatpush1.xpose.msra.mxu0 0.0
    %489 = vmatprep.subr.mxu0 0.0
    %490 = vmatpush1.xpose.msra.mxu0 0.0
    %491 = vmatprep.subr.mxu0 0.0
    %492 = vmatpush1.xpose.msra.mxu0 0.0
    %493 = vmatprep.subr.mxu0 0.0
    %494 = vmatpush1.xpose.msra.mxu0 0.0
    %495 = vmatprep.subr.mxu0 0.0
    %496 = vmatpush1.xpose.msra.mxu0 0.0
    %497 = vmatprep.subr.mxu0 0.0
    %498 = vmatpush1.xpose.msra.mxu0 0.0
    %499 = vmatprep.subr.mxu0 0.0
    %500 = vmatpush1.xpose.msra.mxu0 0.0
    %501 = vmatprep.subr.mxu0 0.0
    %502 = vmatpush1.xpose.msra.mxu0 0.0
    %503 = vmatprep.subr.mxu0 0.0
    %504 = vmatpush1.xpose.msra.mxu0 0.0
    %505 = vmatprep.subr.mxu0 0.0
    %506 = vmatpush1.xpose.msra.mxu0 0.0
    %507 = vmatprep.subr.mxu0 0.0
    %508 = vmatpush1.xpose.msra.mxu0 0.0
    %509 = vmatprep.subr.mxu0 0.0
    %510 = vmatpush1.xpose.msra.mxu0 0.0
    %511 = vmatprep.subr.mxu0 0.0
    %512 = vmatpush1.xpose.msra.mxu0 0.0
    %513 = vmatprep.subr.mxu0 0.0
    %514 = vmatpush1.xpose.msra.mxu0 0.0
    %515 = vmatprep.subr.mxu0 0.0
    %516 = vmatpush1.xpose.msra.mxu0 0.0
    %517 = vmatprep.subr.mxu0 0.0
    %518 = vmatpush1.xpose.msra.mxu0 0.0
    %519 = vmatprep.subr.mxu0 0.0
    %520 = vmatpush1.xpose.msra.mxu0 0.0
    %521 = vmatprep.subr.mxu0 0.0
    %522 = vmatpush1.xpose.msra.mxu0 0.0
    %523 = vmatprep.mubr.f32.mxu0 0.0
    %524 = vmatmul.mubr.f32.gmra.mrb[0].mxu0 %v455
    %v525 = vpop.f32.mrb[0].mxu0
    %v526 = vadd.f32 0.0, %v525
    %v527 = vpop.f32.mrb[0].mxu0
    %528 = vdwg.mxu0
    %v529 = vsel %vm380, %v335, 0
    %v531 = vsel %vm380, %v349, 0
    %533 = vmatprep.subr.mxu0 0.0
    %534 = vmatpush1.xpose.msra.mxu0 %v531
    %535 = vmatprep.subr.mxu0 0.0
    %536 = vmatpush1.xpose.msra.mxu0 0.0
    %537 = vmatprep.subr.mxu0 0.0
    %538 = vmatpush1.xpose.msra.mxu0 0.0
    %539 = vmatprep.subr.mxu0 0.0
    %540 = vmatpush1.xpose.msra.mxu0 0.0
    %541 = vmatprep.subr.mxu0 0.0
    %542 = vmatpush1.xpose.msra.mxu0 0.0
    %543 = vmatprep.subr.mxu0 0.0
    %544 = vmatpush1.xpose.msra.mxu0 0.0
    %545 = vmatprep.subr.mxu0 0.0
    %546 = vmatpush1.xpose.msra.mxu0 0.0
    %547 = vmatprep.subr.mxu0 0.0
    %548 = vmatpush1.xpose.msra.mxu0 0.0
    %549 = vmatprep.subr.mxu0 0.0
    %550 = vmatpush1.xpose.msra.mxu0 0.0
    %551 = vmatprep.subr.mxu0 0.0
    %552 = vmatpush1.xpose.msra.mxu0 0.0
    %553 = vmatprep.subr.mxu0 0.0
    %554 = vmatpush1.xpose.msra.mxu0 0.0
    %555 = vmatprep.subr.mxu0 0.0
    %556 = vmatpush1.xpose.msra.mxu0 0.0
    %557 = vmatprep.subr.mxu0 0.0
    %558 = vmatpush1.xpose.msra.mxu0 0.0
    %559 = vmatprep.subr.mxu0 0.0
    %560 = vmatpush1.xpose.msra.mxu0 0.0
    %561 = vmatprep.subr.mxu0 0.0
    %562 = vmatpush1.xpose.msra.mxu0 0.0
    %563 = vmatprep.subr.mxu0 0.0
    %564 = vmatpush1.xpose.msra.mxu0 0.0
    %565 = vmatprep.subr.mxu0 0.0
    %566 = vmatpush1.xpose.msra.mxu0 0.0
    %567 = vmatprep.subr.mxu0 0.0
    %568 = vmatpush1.xpose.msra.mxu0 0.0
    %569 = vmatprep.subr.mxu0 0.0
    %570 = vmatpush1.xpose.msra.mxu0 0.0
    %571 = vmatprep.subr.mxu0 0.0
    %572 = vmatpush1.xpose.msra.mxu0 0.0
    %573 = vmatprep.subr.mxu0 0.0
    %574 = vmatpush1.xpose.msra.mxu0 0.0
    %575 = vmatprep.subr.mxu0 0.0
    %576 = vmatpush1.xpose.msra.mxu0 0.0
    %577 = vmatprep.subr.mxu0 0.0
    %578 = vmatpush1.xpose.msra.mxu0 0.0
    %579 = vmatprep.subr.mxu0 0.0
    %580 = vmatpush1.xpose.msra.mxu0 0.0
    %581 = vmatprep.subr.mxu0 0.0
    %582 = vmatpush1.xpose.msra.mxu0 0.0
    %583 = vmatprep.subr.mxu0 0.0
    %584 = vmatpush1.xpose.msra.mxu0 0.0
    %585 = vmatprep.subr.mxu0 0.0
    %586 = vmatpush1.xpose.msra.mxu0 0.0
    %587 = vmatprep.subr.mxu0 0.0
    %588 = vmatpush1.xpose.msra.mxu0 0.0
    %589 = vmatprep.subr.mxu0 0.0
    %590 = vmatpush1.xpose.msra.mxu0 0.0
    %591 = vmatprep.subr.mxu0 0.0
    %592 = vmatpush1.xpose.msra.mxu0 0.0
    %593 = vmatprep.subr.mxu0 0.0
    %594 = vmatpush1.xpose.msra.mxu0 0.0
    %595 = vmatprep.subr.mxu0 0.0
    %596 = vmatpush1.xpose.msra.mxu0 0.0
    %597 = vmatprep.mubr.f32.mxu0 0.0
    %598 = vmatmul.mubr.f32.gmra.mrb[0].mxu0 %v529
    %v599 = vpop.f32.mrb[0].mxu0
    %v600 = vadd.f32 0.0, %v599
    %v601 = vpop.f32.mrb[0].mxu0
    %602 = vdwg.mxu0
    %v603 = vsel %vm380, %v337, 0
    %v605 = vsel %vm380, %v351, 0
    %607 = vmatprep.subr.mxu0 0.0
    %608 = vmatpush1.xpose.msra.mxu0 %v605
    %609 = vmatprep.subr.mxu0 0.0
    %610 = vmatpush1.xpose.msra.mxu0 0.0
    %611 = vmatprep.subr.mxu0 0.0
    %612 = vmatpush1.xpose.msra.mxu0 0.0
    %613 = vmatprep.subr.mxu0 0.0
    %614 = vmatpush1.xpose.msra.mxu0 0.0
    %615 = vmatprep.subr.mxu0 0.0
    %616 = vmatpush1.xpose.msra.mxu0 0.0
    %617 = vmatprep.subr.mxu0 0.0
    %618 = vmatpush1.xpose.msra.mxu0 0.0
    %619 = vmatprep.subr.mxu0 0.0
    %620 = vmatpush1.xpose.msra.mxu0 0.0
    %621 = vmatprep.subr.mxu0 0.0
    %622 = vmatpush1.xpose.msra.mxu0 0.0
    %623 = vmatprep.subr.mxu0 0.0
    %624 = vmatpush1.xpose.msra.mxu0 0.0
    %625 = vmatprep.subr.mxu0 0.0
    %626 = vmatpush1.xpose.msra.mxu0 0.0
    %627 = vmatprep.subr.mxu0 0.0
    %628 = vmatpush1.xpose.msra.mxu0 0.0
    %629 = vmatprep.subr.mxu0 0.0
    %630 = vmatpush1.xpose.msra.mxu0 0.0
    %631 = vmatprep.subr.mxu0 0.0
    %632 = vmatpush1.xpose.msra.mxu0 0.0
    %633 = vmatprep.subr.mxu0 0.0
    %634 = vmatpush1.xpose.msra.mxu0 0.0
    %635 = vmatprep.subr.mxu0 0.0
    %636 = vmatpush1.xpose.msra.mxu0 0.0
    %637 = vmatprep.subr.mxu0 0.0
    %638 = vmatpush1.xpose.msra.mxu0 0.0
    %639 = vmatprep.subr.mxu0 0.0
    %640 = vmatpush1.xpose.msra.mxu0 0.0
    %641 = vmatprep.subr.mxu0 0.0
    %642 = vmatpush1.xpose.msra.mxu0 0.0
    %643 = vmatprep.subr.mxu0 0.0
    %644 = vmatpush1.xpose.msra.mxu0 0.0
    %645 = vmatprep.subr.mxu0 0.0
    %646 = vmatpush1.xpose.msra.mxu0 0.0
    %647 = vmatprep.subr.mxu0 0.0
    %648 = vmatpush1.xpose.msra.mxu0 0.0
    %649 = vmatprep.subr.mxu0 0.0
    %650 = vmatpush1.xpose.msra.mxu0 0.0
    %651 = vmatprep.subr.mxu0 0.0
    %652 = vmatpush1.xpose.msra.mxu0 0.0
    %653 = vmatprep.subr.mxu0 0.0
    %654 = vmatpush1.xpose.msra.mxu0 0.0
    %655 = vmatprep.subr.mxu0 0.0
    %656 = vmatpush1.xpose.msra.mxu0 0.0
    %657 = vmatprep.subr.mxu0 0.0
    %658 = vmatpush1.xpose.msra.mxu0 0.0
    %659 = vmatprep.subr.mxu0 0.0
    %660 = vmatpush1.xpose.msra.mxu0 0.0
    %661 = vmatprep.subr.mxu0 0.0
    %662 = vmatpush1.xpose.msra.mxu0 0.0
    %663 = vmatprep.subr.mxu0 0.0
    %664 = vmatpush1.xpose.msra.mxu0 0.0
    %665 = vmatprep.subr.mxu0 0.0
    %666 = vmatpush1.xpose.msra.mxu0 0.0
    %667 = vmatprep.subr.mxu0 0.0
    %668 = vmatpush1.xpose.msra.mxu0 0.0
    %669 = vmatprep.subr.mxu0 0.0
    %670 = vmatpush1.xpose.msra.mxu0 0.0
    %671 = vmatprep.mubr.f32.mxu0 0.0
    %672 = vmatmul.mubr.f32.gmra.mrb[0].mxu0 %v603
    %v673 = vpop.f32.mrb[0].mxu0
    %v674 = vadd.f32 0.0, %v673
    %v675 = vpop.f32.mrb[0].mxu0
    %676 = vdwg.mxu0
    %v677 = vsel %vm380, %v339, 0
    %v679 = vsel %vm380, %v353, 0
    %681 = vmatprep.subr.mxu0 0.0
    %682 = vmatpush1.xpose.msra.mxu0 %v679
    %683 = vmatprep.subr.mxu0 0.0
    %684 = vmatpush1.xpose.msra.mxu0 0.0
    %685 = vmatprep.subr.mxu0 0.0
    %686 = vmatpush1.xpose.msra.mxu0 0.0
    %687 = vmatprep.subr.mxu0 0.0
    %688 = vmatpush1.xpose.msra.mxu0 0.0
    %689 = vmatprep.subr.mxu0 0.0
    %690 = vmatpush1.xpose.msra.mxu0 0.0
    %691 = vmatprep.subr.mxu0 0.0
    %692 = vmatpush1.xpose.msra.mxu0 0.0
    %693 = vmatprep.subr.mxu0 0.0
    %694 = vmatpush1.xpose.msra.mxu0 0.0
    %695 = vmatprep.subr.mxu0 0.0
    %696 = vmatpush1.xpose.msra.mxu0 0.0
    %697 = vmatprep.subr.mxu0 0.0
    %698 = vmatpush1.xpose.msra.mxu0 0.0
    %699 = vmatprep.subr.mxu0 0.0
    %700 = vmatpush1.xpose.msra.mxu0 0.0
    %701 = vmatprep.subr.mxu0 0.0
    %702 = vmatpush1.xpose.msra.mxu0 0.0
    %703 = vmatprep.subr.mxu0 0.0
    %704 = vmatpush1.xpose.msra.mxu0 0.0
    %705 = vmatprep.subr.mxu0 0.0
    %706 = vmatpush1.xpose.msra.mxu0 0.0
    %707 = vmatprep.subr.mxu0 0.0
    %708 = vmatpush1.xpose.msra.mxu0 0.0
    %709 = vmatprep.subr.mxu0 0.0
    %710 = vmatpush1.xpose.msra.mxu0 0.0
    %711 = vmatprep.subr.mxu0 0.0
    %712 = vmatpush1.xpose.msra.mxu0 0.0
    %713 = vmatprep.subr.mxu0 0.0
    %714 = vmatpush1.xpose.msra.mxu0 0.0
    %715 = vmatprep.subr.mxu0 0.0
    %716 = vmatpush1.xpose.msra.mxu0 0.0
    %717 = vmatprep.subr.mxu0 0.0
    %718 = vmatpush1.xpose.msra.mxu0 0.0
    %719 = vmatprep.subr.mxu0 0.0
    %720 = vmatpush1.xpose.msra.mxu0 0.0
    %721 = vmatprep.subr.mxu0 0.0
    %722 = vmatpush1.xpose.msra.mxu0 0.0
    %723 = vmatprep.subr.mxu0 0.0
    %724 = vmatpush1.xpose.msra.mxu0 0.0
    %725 = vmatprep.subr.mxu0 0.0
    %726 = vmatpush1.xpose.msra.mxu0 0.0
    %727 = vmatprep.subr.mxu0 0.0
    %728 = vmatpush1.xpose.msra.mxu0 0.0
    %729 = vmatprep.subr.mxu0 0.0
    %730 = vmatpush1.xpose.msra.mxu0 0.0
    %731 = vmatprep.subr.mxu0 0.0
    %732 = vmatpush1.xpose.msra.mxu0 0.0
    %733 = vmatprep.subr.mxu0 0.0
    %734 = vmatpush1.xpose.msra.mxu0 0.0
    %735 = vmatprep.subr.mxu0 0.0
    %736 = vmatpush1.xpose.msra.mxu0 0.0
    %737 = vmatprep.subr.mxu0 0.0
    %738 = vmatpush1.xpose.msra.mxu0 0.0
    %739 = vmatprep.subr.mxu0 0.0
    %740 = vmatpush1.xpose.msra.mxu0 0.0
    %741 = vmatprep.subr.mxu0 0.0
    %742 = vmatpush1.xpose.msra.mxu0 0.0
    %743 = vmatprep.subr.mxu0 0.0
    %744 = vmatpush1.xpose.msra.mxu0 0.0
    %745 = vmatprep.mubr.f32.mxu0 0.0
    %746 = vmatmul.mubr.f32.gmra.mrb[0].mxu0 %v677
    %v747 = vpop.f32.mrb[0].mxu0
    %v748 = vadd.f32 0.0, %v747
    %v749 = vpop.f32.mrb[0].mxu0
    %750 = vdwg.mxu0
    %v751 = vsel %vm380, %v341, 0
    %v753 = vsel %vm380, %v355, 0
    %755 = vmatprep.subr.mxu0 0.0
    %756 = vmatpush1.xpose.msra.mxu0 %v753
    %757 = vmatprep.subr.mxu0 0.0
    %758 = vmatpush1.xpose.msra.mxu0 0.0
    %759 = vmatprep.subr.mxu0 0.0
    %760 = vmatpush1.xpose.msra.mxu0 0.0
    %761 = vmatprep.subr.mxu0 0.0
    %762 = vmatpush1.xpose.msra.mxu0 0.0
    %763 = vmatprep.subr.mxu0 0.0
    %764 = vmatpush1.xpose.msra.mxu0 0.0
    %765 = vmatprep.subr.mxu0 0.0
    %766 = vmatpush1.xpose.msra.mxu0 0.0
    %767 = vmatprep.subr.mxu0 0.0
    %768 = vmatpush1.xpose.msra.mxu0 0.0
    %769 = vmatprep.subr.mxu0 0.0
    %770 = vmatpush1.xpose.msra.mxu0 0.0
    %771 = vmatprep.subr.mxu0 0.0
    %772 = vmatpush1.xpose.msra.mxu0 0.0
    %773 = vmatprep.subr.mxu0 0.0
    %774 = vmatpush1.xpose.msra.mxu0 0.0
    %775 = vmatprep.subr.mxu0 0.0
    %776 = vmatpush1.xpose.msra.mxu0 0.0
    %777 = vmatprep.subr.mxu0 0.0
    %778 = vmatpush1.xpose.msra.mxu0 0.0
    %779 = vmatprep.subr.mxu0 0.0
    %780 = vmatpush1.xpose.msra.mxu0 0.0
    %781 = vmatprep.subr.mxu0 0.0
    %782 = vmatpush1.xpose.msra.mxu0 0.0
    %783 = vmatprep.subr.mxu0 0.0
    %784 = vmatpush1.xpose.msra.mxu0 0.0
    %785 = vmatprep.subr.mxu0 0.0
    %786 = vmatpush1.xpose.msra.mxu0 0.0
    %787 = vmatprep.subr.mxu0 0.0
    %788 = vmatpush1.xpose.msra.mxu0 0.0
    %789 = vmatprep.subr.mxu0 0.0
    %790 = vmatpush1.xpose.msra.mxu0 0.0
    %791 = vmatprep.subr.mxu0 0.0
    %792 = vmatpush1.xpose.msra.mxu0 0.0
    %793 = vmatprep.subr.mxu0 0.0
    %794 = vmatpush1.xpose.msra.mxu0 0.0
    %795 = vmatprep.subr.mxu0 0.0
    %796 = vmatpush1.xpose.msra.mxu0 0.0
    %797 = vmatprep.subr.mxu0 0.0
    %798 = vmatpush1.xpose.msra.mxu0 0.0
    %799 = vmatprep.subr.mxu0 0.0
    %800 = vmatpush1.xpose.msra.mxu0 0.0
    %801 = vmatprep.subr.mxu0 0.0
    %802 = vmatpush1.xpose.msra.mxu0 0.0
    %803 = vmatprep.subr.mxu0 0.0
    %804 = vmatpush1.xpose.msra.mxu0 0.0
    %805 = vmatprep.subr.mxu0 0.0
    %806 = vmatpush1.xpose.msra.mxu0 0.0
    %807 = vmatprep.subr.mxu0 0.0
    %808 = vmatpush1.xpose.msra.mxu0 0.0
    %809 = vmatprep.subr.mxu0 0.0
    %810 = vmatpush1.xpose.msra.mxu0 0.0
    %811 = vmatprep.subr.mxu0 0.0
    %812 = vmatpush1.xpose.msra.mxu0 0.0
    %813 = vmatprep.subr.mxu0 0.0
    %814 = vmatpush1.xpose.msra.mxu0 0.0
    %815 = vmatprep.subr.mxu0 0.0
    %816 = vmatpush1.xpose.msra.mxu0 0.0
    %817 = vmatprep.subr.mxu0 0.0
    %818 = vmatpush1.xpose.msra.mxu0 0.0
    %819 = vmatprep.mubr.f32.mxu0 0.0
    %820 = vmatmul.mubr.f32.gmra.mrb[0].mxu0 %v751
    %v821 = vpop.f32.mrb[0].mxu0
    %v822 = vadd.f32 0.0, %v821
    %v823 = vpop.f32.mrb[0].mxu0
    %824 = vdwg.mxu0
    %v825 = vsel %vm380, %v343, 0
    %v827 = vsel %vm380, %v357, 0
    %829 = vmatprep.subr.mxu0 0.0
    %830 = vmatpush1.xpose.msra.mxu0 %v827
    %831 = vmatprep.subr.mxu0 0.0
    %832 = vmatpush1.xpose.msra.mxu0 0.0
    %833 = vmatprep.subr.mxu0 0.0
    %834 = vmatpush1.xpose.msra.mxu0 0.0
    %835 = vmatprep.subr.mxu0 0.0
    %836 = vmatpush1.xpose.msra.mxu0 0.0
    %837 = vmatprep.subr.mxu0 0.0
    %838 = vmatpush1.xpose.msra.mxu0 0.0
    %839 = vmatprep.subr.mxu0 0.0
    %840 = vmatpush1.xpose.msra.mxu0 0.0
    %841 = vmatprep.subr.mxu0 0.0
    %842 = vmatpush1.xpose.msra.mxu0 0.0
    %843 = vmatprep.subr.mxu0 0.0
    %844 = vmatpush1.xpose.msra.mxu0 0.0
    %845 = vmatprep.subr.mxu0 0.0
    %846 = vmatpush1.xpose.msra.mxu0 0.0
    %847 = vmatprep.subr.mxu0 0.0
    %848 = vmatpush1.xpose.msra.mxu0 0.0
    %849 = vmatprep.subr.mxu0 0.0
    %850 = vmatpush1.xpose.msra.mxu0 0.0
    %851 = vmatprep.subr.mxu0 0.0
    %852 = vmatpush1.xpose.msra.mxu0 0.0
    %853 = vmatprep.subr.mxu0 0.0
    %854 = vmatpush1.xpose.msra.mxu0 0.0
    %855 = vmatprep.subr.mxu0 0.0
    %856 = vmatpush1.xpose.msra.mxu0 0.0
    %857 = vmatprep.subr.mxu0 0.0
    %858 = vmatpush1.xpose.msra.mxu0 0.0
    %859 = vmatprep.subr.mxu0 0.0
    %860 = vmatpush1.xpose.msra.mxu0 0.0
    %861 = vmatprep.subr.mxu0 0.0
    %862 = vmatpush1.xpose.msra.mxu0 0.0
    %863 = vmatprep.subr.mxu0 0.0
    %864 = vmatpush1.xpose.msra.mxu0 0.0
    %865 = vmatprep.subr.mxu0 0.0
    %866 = vmatpush1.xpose.msra.mxu0 0.0
    %867 = vmatprep.subr.mxu0 0.0
    %868 = vmatpush1.xpose.msra.mxu0 0.0
    %869 = vmatprep.subr.mxu0 0.0
    %870 = vmatpush1.xpose.msra.mxu0 0.0
    %871 = vmatprep.subr.mxu0 0.0
    %872 = vmatpush1.xpose.msra.mxu0 0.0
    %873 = vmatprep.subr.mxu0 0.0
    %874 = vmatpush1.xpose.msra.mxu0 0.0
    %875 = vmatprep.subr.mxu0 0.0
    %876 = vmatpush1.xpose.msra.mxu0 0.0
    %877 = vmatprep.subr.mxu0 0.0
    %878 = vmatpush1.xpose.msra.mxu0 0.0
    %879 = vmatprep.subr.mxu0 0.0
    %880 = vmatpush1.xpose.msra.mxu0 0.0
    %881 = vmatprep.subr.mxu0 0.0
    %882 = vmatpush1.xpose.msra.mxu0 0.0
    %883 = vmatprep.subr.mxu0 0.0
    %884 = vmatpush1.xpose.msra.mxu0 0.0
    %885 = vmatprep.subr.mxu0 0.0
    %886 = vmatpush1.xpose.msra.mxu0 0.0
    %887 = vmatprep.subr.mxu0 0.0
    %888 = vmatpush1.xpose.msra.mxu0 0.0
    %889 = vmatprep.subr.mxu0 0.0
    %890 = vmatpush1.xpose.msra.mxu0 0.0
    %891 = vmatprep.subr.mxu0 0.0
    %892 = vmatpush1.xpose.msra.mxu0 0.0
    %893 = vmatprep.mubr.f32.mxu0 0.0
    %894 = vmatmul.mubr.f32.gmra.mrb[0].mxu0 %v825
    %v895 = vpop.f32.mrb[0].mxu0
    %v896 = vadd.f32 0.0, %v895
    %v897 = vpop.f32.mrb[0].mxu0
    %898 = vdwg.mxu0
    %v899 = vsel %vm380, %v345, 0
    %v901 = vsel %vm380, %v359, 0
    %903 = vmatprep.subr.mxu0 0.0
    %904 = vmatpush1.xpose.msra.mxu0 %v901
    %905 = vmatprep.subr.mxu0 0.0
    %906 = vmatpush1.xpose.msra.mxu0 0.0
    %907 = vmatprep.subr.mxu0 0.0
    %908 = vmatpush1.xpose.msra.mxu0 0.0
    %909 = vmatprep.subr.mxu0 0.0
    %910 = vmatpush1.xpose.msra.mxu0 0.0
    %911 = vmatprep.subr.mxu0 0.0
    %912 = vmatpush1.xpose.msra.mxu0 0.0
    %913 = vmatprep.subr.mxu0 0.0
    %914 = vmatpush1.xpose.msra.mxu0 0.0
    %915 = vmatprep.subr.mxu0 0.0
    %916 = vmatpush1.xpose.msra.mxu0 0.0
    %917 = vmatprep.subr.mxu0 0.0
    %918 = vmatpush1.xpose.msra.mxu0 0.0
    %919 = vmatprep.subr.mxu0 0.0
    %920 = vmatpush1.xpose.msra.mxu0 0.0
    %921 = vmatprep.subr.mxu0 0.0
    %922 = vmatpush1.xpose.msra.mxu0 0.0
    %923 = vmatprep.subr.mxu0 0.0
    %924 = vmatpush1.xpose.msra.mxu0 0.0
    %925 = vmatprep.subr.mxu0 0.0
    %926 = vmatpush1.xpose.msra.mxu0 0.0
    %927 = vmatprep.subr.mxu0 0.0
    %928 = vmatpush1.xpose.msra.mxu0 0.0
    %929 = vmatprep.subr.mxu0 0.0
    %930 = vmatpush1.xpose.msra.mxu0 0.0
    %931 = vmatprep.subr.mxu0 0.0
    %932 = vmatpush1.xpose.msra.mxu0 0.0
    %933 = vmatprep.subr.mxu0 0.0
    %934 = vmatpush1.xpose.msra.mxu0 0.0
    %935 = vmatprep.subr.mxu0 0.0
    %936 = vmatpush1.xpose.msra.mxu0 0.0
    %937 = vmatprep.subr.mxu0 0.0
    %938 = vmatpush1.xpose.msra.mxu0 0.0
    %939 = vmatprep.subr.mxu0 0.0
    %940 = vmatpush1.xpose.msra.mxu0 0.0
    %941 = vmatprep.subr.mxu0 0.0
    %942 = vmatpush1.xpose.msra.mxu0 0.0
    %943 = vmatprep.subr.mxu0 0.0
    %944 = vmatpush1.xpose.msra.mxu0 0.0
    %945 = vmatprep.subr.mxu0 0.0
    %946 = vmatpush1.xpose.msra.mxu0 0.0
    %947 = vmatprep.subr.mxu0 0.0
    %948 = vmatpush1.xpose.msra.mxu0 0.0
    %949 = vmatprep.subr.mxu0 0.0
    %950 = vmatpush1.xpose.msra.mxu0 0.0
    %951 = vmatprep.subr.mxu0 0.0
    %952 = vmatpush1.xpose.msra.mxu0 0.0
    %953 = vmatprep.subr.mxu0 0.0
    %954 = vmatpush1.xpose.msra.mxu0 0.0
    %955 = vmatprep.subr.mxu0 0.0
    %956 = vmatpush1.xpose.msra.mxu0 0.0
    %957 = vmatprep.subr.mxu0 0.0
    %958 = vmatpush1.xpose.msra.mxu0 0.0
    %959 = vmatprep.subr.mxu0 0.0
    %960 = vmatpush1.xpose.msra.mxu0 0.0
    %961 = vmatprep.subr.mxu0 0.0
    %962 = vmatpush1.xpose.msra.mxu0 0.0
    %963 = vmatprep.subr.mxu0 0.0
    %964 = vmatpush1.xpose.msra.mxu0 0.0
    %965 = vmatprep.subr.mxu0 0.0
    %966 = vmatpush1.xpose.msra.mxu0 0.0
    %967 = vmatprep.mubr.f32.mxu0 0.0
    %968 = vmatmul.mubr.f32.gmra.mrb[0].mxu0 %v899
    %v969 = vpop.f32.mrb[0].mxu0
    %v970 = vadd.f32 0.0, %v969
    %v971 = vpop.f32.mrb[0].mxu0
    %972 = vdwg.mxu0
    %v973 = vmul.f32 %v452, 0.35355338
    %v974 = vmul.f32 %v526, 0.35355338
    %v975 = vmul.f32 %v600, 0.35355338
    %v976 = vmul.f32 %v674, 0.35355338
    %v977 = vmul.f32 %v748, 0.35355338
    %v978 = vmul.f32 %v822, 0.35355338
    %v979 = vmul.f32 %v896, 0.35355338
    %v980 = vmul.f32 %v970, 0.35355338
    %v981 = vsel %vm380, %v973, -inf
    %982 = vmax.xlane.f32.xlu0 %v981
    %v983 = vpop.xlane.xlu0 %982
    %v984 = vsel %vm380, %v974, -inf
    %985 = vmax.xlane.f32.xlu0 %v984
    %v986 = vpop.xlane.xlu0 %985
    %v987 = vsel %vm380, %v975, -inf
    %988 = vmax.xlane.f32.xlu0 %v987
    %v989 = vpop.xlane.xlu0 %988
    %v990 = vsel %vm380, %v976, -inf
    %991 = vmax.xlane.f32.xlu0 %v990
    %v992 = vpop.xlane.xlu0 %991
    %v993 = vsel %vm380, %v977, -inf
    %994 = vmax.xlane.f32.xlu0 %v993
    %v995 = vpop.xlane.xlu0 %994
    %v996 = vsel %vm380, %v978, -inf
    %997 = vmax.xlane.f32.xlu0 %v996
    %v998 = vpop.xlane.xlu0 %997
    %v999 = vsel %vm380, %v979, -inf
    %1000 = vmax.xlane.f32.xlu0 %v999
    %v1001 = vpop.xlane.xlu0 %1000
    %v1002 = vsel %vm380, %v980, -inf
    %1003 = vmax.xlane.f32.xlu0 %v1002
    %v1004 = vpop.xlane.xlu0 %1003
    %v1005 = vsub.f32 %v973, %v983
    %v1006 = vsub.f32 %v974, %v986
    %v1007 = vsub.f32 %v975, %v989
    %v1008 = vsub.f32 %v976, %v992
    %v1009 = vsub.f32 %v977, %v995
    %v1010 = vsub.f32 %v978, %v998
    %v1011 = vsub.f32 %v979, %v1001
    %v1012 = vsub.f32 %v980, %v1004
    %v1013 = vmul.f32 %v1005, 1.442695
    %v1014 = vpow.pop %v1013
    %v1015 = vmul.f32 %v1006, 1.442695
    %v1016 = vpow.pop %v1015
    %v1017 = vmul.f32 %v1007, 1.442695
    %v1018 = vpow.pop %v1017
    %v1019 = vmul.f32 %v1008, 1.442695
    %v1020 = vpow.pop %v1019
    %v1021 = vmul.f32 %v1009, 1.442695
    %v1022 = vpow.pop %v1021
    %v1023 = vmul.f32 %v1010, 1.442695
    %v1024 = vpow.pop %v1023
    %v1025 = vmul.f32 %v1011, 1.442695
    %v1026 = vpow.pop %v1025
    %v1027 = vmul.f32 %v1012, 1.442695
    %v1028 = vpow.pop %v1027
    %v1029 = vsel %vm380, %v1014, 0.0
    %1030 = vadd.xlane.f32.xlu0 %v1029
    %v1031 = vpop.xlane.xlu0 %1030
    %v1032 = vsel %vm380, %v1016, 0.0
    %1033 = vadd.xlane.f32.xlu0 %v1032
    %v1034 = vpop.xlane.xlu0 %1033
    %v1035 = vsel %vm380, %v1018, 0.0
    %1036 = vadd.xlane.f32.xlu0 %v1035
    %v1037 = vpop.xlane.xlu0 %1036
    %v1038 = vsel %vm380, %v1020, 0.0
    %1039 = vadd.xlane.f32.xlu0 %v1038
    %v1040 = vpop.xlane.xlu0 %1039
    %v1041 = vsel %vm380, %v1022, 0.0
    %1042 = vadd.xlane.f32.xlu0 %v1041
    %v1043 = vpop.xlane.xlu0 %1042
    %v1044 = vsel %vm380, %v1024, 0.0
    %1045 = vadd.xlane.f32.xlu0 %v1044
    %v1046 = vpop.xlane.xlu0 %1045
    %v1047 = vsel %vm380, %v1026, 0.0
    %1048 = vadd.xlane.f32.xlu0 %v1047
    %v1049 = vpop.xlane.xlu0 %1048
    %v1050 = vsel %vm380, %v1028, 0.0
    %1051 = vadd.xlane.f32.xlu0 %v1050
    %v1052 = vpop.xlane.xlu0 %1051
    %v1053 = vrcp.pop %v1031
    %v1054 = vmul.f32 %v1014, %v1053
    %v1055 = vrcp.pop %v1034
    %v1056 = vmul.f32 %v1016, %v1055
    %v1057 = vrcp.pop %v1037
    %v1058 = vmul.f32 %v1018, %v1057
    %v1059 = vrcp.pop %v1040
    %v1060 = vmul.f32 %v1020, %v1059
    %v1061 = vrcp.pop %v1043
    %v1062 = vmul.f32 %v1022, %v1061
    %v1063 = vrcp.pop %v1046
    %v1064 = vmul.f32 %v1024, %v1063
    %v1065 = vrcp.pop %v1049
    %v1066 = vmul.f32 %v1026, %v1065
    %v1067 = vrcp.pop %v1052
    %v1068 = vmul.f32 %v1028, %v1067
    %v1070 = vsel %vm380, %v1054, 0
    %1072 = vmatprep.subr.mxu0 0.0
    %1073 = vmatpush1.msra.mxu0 %v324
    %1074 = vmatprep.subr.mxu0 0.0
    %1075 = vmatpush1.msra.mxu0 0.0
    %1076 = vmatprep.subr.mxu0 0.0
    %1077 = vmatpush1.msra.mxu0 0.0
    %1078 = vmatprep.subr.mxu0 0.0
    %1079 = vmatpush1.msra.mxu0 0.0
    %1080 = vmatprep.subr.mxu0 0.0
    %1081 = vmatpush1.msra.mxu0 0.0
    %1082 = vmatprep.subr.mxu0 0.0
    %1083 = vmatpush1.msra.mxu0 0.0
    %1084 = vmatprep.subr.mxu0 0.0
    %1085 = vmatpush1.msra.mxu0 0.0
    %1086 = vmatprep.subr.mxu0 0.0
    %1087 = vmatpush1.msra.mxu0 0.0
    %1088 = vmatprep.subr.mxu0 0.0
    %1089 = vmatpush1.msra.mxu0 0.0
    %1090 = vmatprep.subr.mxu0 0.0
    %1091 = vmatpush1.msra.mxu0 0.0
    %1092 = vmatprep.subr.mxu0 0.0
    %1093 = vmatpush1.msra.mxu0 0.0
    %1094 = vmatprep.subr.mxu0 0.0
    %1095 = vmatpush1.msra.mxu0 0.0
    %1096 = vmatprep.subr.mxu0 0.0
    %1097 = vmatpush1.msra.mxu0 0.0
    %1098 = vmatprep.subr.mxu0 0.0
    %1099 = vmatpush1.msra.mxu0 0.0
    %1100 = vmatprep.subr.mxu0 0.0
    %1101 = vmatpush1.msra.mxu0 0.0
    %1102 = vmatprep.subr.mxu0 0.0
    %1103 = vmatpush1.msra.mxu0 0.0
    %1104 = vmatprep.subr.mxu0 0.0
    %1105 = vmatpush1.msra.mxu0 0.0
    %1106 = vmatprep.subr.mxu0 0.0
    %1107 = vmatpush1.msra.mxu0 0.0
    %1108 = vmatprep.subr.mxu0 0.0
    %1109 = vmatpush1.msra.mxu0 0.0
    %1110 = vmatprep.subr.mxu0 0.0
    %1111 = vmatpush1.msra.mxu0 0.0
    %1112 = vmatprep.subr.mxu0 0.0
    %1113 = vmatpush1.msra.mxu0 0.0
    %1114 = vmatprep.subr.mxu0 0.0
    %1115 = vmatpush1.msra.mxu0 0.0
    %1116 = vmatprep.subr.mxu0 0.0
    %1117 = vmatpush1.msra.mxu0 0.0
    %1118 = vmatprep.subr.mxu0 0.0
    %1119 = vmatpush1.msra.mxu0 0.0
    %1120 = vmatprep.subr.mxu0 0.0
    %1121 = vmatpush1.msra.mxu0 0.0
    %1122 = vmatprep.subr.mxu0 0.0
    %1123 = vmatpush1.msra.mxu0 0.0
    %1124 = vmatprep.subr.mxu0 0.0
    %1125 = vmatpush1.msra.mxu0 0.0
    %1126 = vmatprep.subr.mxu0 0.0
    %1127 = vmatpush1.msra.mxu0 0.0
    %1128 = vmatprep.subr.mxu0 0.0
    %1129 = vmatpush1.msra.mxu0 0.0
    %1130 = vmatprep.subr.mxu0 0.0
    %1131 = vmatpush1.msra.mxu0 0.0
    %1132 = vmatprep.subr.mxu0 0.0
    %1133 = vmatpush1.msra.mxu0 0.0
    %1134 = vmatprep.subr.mxu0 0.0
    %1135 = vmatpush1.msra.mxu0 0.0
    %1136 = vmatprep.mubr.f32.mxu0 0.0
    %1137 = vmatmul.mubr.f32.gmra.mrb[0].mxu0 %v1070
    %v1138 = vpop.f32.mrb[0].mxu0
    %v1139 = vadd.f32 0.0, %v1138
    %v1140 = vpop.f32.mrb[0].mxu0
    %1141 = vdwg.mxu0
    %v1143 = vsel %vm380, %v1056, 0
    %1145 = vmatprep.subr.mxu0 0.0
    %1146 = vmatpush1.msra.mxu0 %v329
    %1147 = vmatprep.subr.mxu0 0.0
    %1148 = vmatpush1.msra.mxu0 0.0
    %1149 = vmatprep.subr.mxu0 0.0
    %1150 = vmatpush1.msra.mxu0 0.0
    %1151 = vmatprep.subr.mxu0 0.0
    %1152 = vmatpush1.msra.mxu0 0.0
    %1153 = vmatprep.subr.mxu0 0.0
    %1154 = vmatpush1.msra.mxu0 0.0
    %1155 = vmatprep.subr.mxu0 0.0
    %1156 = vmatpush1.msra.mxu0 0.0
    %1157 = vmatprep.subr.mxu0 0.0
    %1158 = vmatpush1.msra.mxu0 0.0
    %1159 = vmatprep.subr.mxu0 0.0
    %1160 = vmatpush1.msra.mxu0 0.0
    %1161 = vmatprep.subr.mxu0 0.0
    %1162 = vmatpush1.msra.mxu0 0.0
    %1163 = vmatprep.subr.mxu0 0.0
    %1164 = vmatpush1.msra.mxu0 0.0
    %1165 = vmatprep.subr.mxu0 0.0
    %1166 = vmatpush1.msra.mxu0 0.0
    %1167 = vmatprep.subr.mxu0 0.0
    %1168 = vmatpush1.msra.mxu0 0.0
    %1169 = vmatprep.subr.mxu0 0.0
    %1170 = vmatpush1.msra.mxu0 0.0
    %1171 = vmatprep.subr.mxu0 0.0
    %1172 = vmatpush1.msra.mxu0 0.0
    %1173 = vmatprep.subr.mxu0 0.0
    %1174 = vmatpush1.msra.mxu0 0.0
    %1175 = vmatprep.subr.mxu0 0.0
    %1176 = vmatpush1.msra.mxu0 0.0
    %1177 = vmatprep.subr.mxu0 0.0
    %1178 = vmatpush1.msra.mxu0 0.0
    %1179 = vmatprep.subr.mxu0 0.0
    %1180 = vmatpush1.msra.mxu0 0.0
    %1181 = vmatprep.subr.mxu0 0.0
    %1182 = vmatpush1.msra.mxu0 0.0
    %1183 = vmatprep.subr.mxu0 0.0
    %1184 = vmatpush1.msra.mxu0 0.0
    %1185 = vmatprep.subr.mxu0 0.0
    %1186 = vmatpush1.msra.mxu0 0.0
    %1187 = vmatprep.subr.mxu0 0.0
    %1188 = vmatpush1.msra.mxu0 0.0
    %1189 = vmatprep.subr.mxu0 0.0
    %1190 = vmatpush1.msra.mxu0 0.0
    %1191 = vmatprep.subr.mxu0 0.0
    %1192 = vmatpush1.msra.mxu0 0.0
    %1193 = vmatprep.subr.mxu0 0.0
    %1194 = vmatpush1.msra.mxu0 0.0
    %1195 = vmatprep.subr.mxu0 0.0
    %1196 = vmatpush1.msra.mxu0 0.0
    %1197 = vmatprep.subr.mxu0 0.0
    %1198 = vmatpush1.msra.mxu0 0.0
    %1199 = vmatprep.subr.mxu0 0.0
    %1200 = vmatpush1.msra.mxu0 0.0
    %1201 = vmatprep.subr.mxu0 0.0
    %1202 = vmatpush1.msra.mxu0 0.0
    %1203 = vmatprep.subr.mxu0 0.0
    %1204 = vmatpush1.msra.mxu0 0.0
    %1205 = vmatprep.subr.mxu0 0.0
    %1206 = vmatpush1.msra.mxu0 0.0
    %1207 = vmatprep.subr.mxu0 0.0
    %1208 = vmatpush1.msra.mxu0 0.0
    %1209 = vmatprep.mubr.f32.mxu0 0.0
    %1210 = vmatmul.mubr.f32.gmra.mrb[0].mxu0 %v1143
    %v1211 = vpop.f32.mrb[0].mxu0
    %v1212 = vadd.f32 0.0, %v1211
    %v1213 = vpop.f32.mrb[0].mxu0
    %1214 = vdwg.mxu0
    %v1216 = vsel %vm380, %v1058, 0
    %1218 = vmatprep.subr.mxu0 0.0
    %1219 = vmatpush1.msra.mxu0 %v363
    %1220 = vmatprep.subr.mxu0 0.0
    %1221 = vmatpush1.msra.mxu0 0.0
    %1222 = vmatprep.subr.mxu0 0.0
    %1223 = vmatpush1.msra.mxu0 0.0
    %1224 = vmatprep.subr.mxu0 0.0
    %1225 = vmatpush1.msra.mxu0 0.0
    %1226 = vmatprep.subr.mxu0 0.0
    %1227 = vmatpush1.msra.mxu0 0.0
    %1228 = vmatprep.subr.mxu0 0.0
    %1229 = vmatpush1.msra.mxu0 0.0
    %1230 = vmatprep.subr.mxu0 0.0
    %1231 = vmatpush1.msra.mxu0 0.0
    %1232 = vmatprep.subr.mxu0 0.0
    %1233 = vmatpush1.msra.mxu0 0.0
    %1234 = vmatprep.subr.mxu0 0.0
    %1235 = vmatpush1.msra.mxu0 0.0
    %1236 = vmatprep.subr.mxu0 0.0
    %1237 = vmatpush1.msra.mxu0 0.0
    %1238 = vmatprep.subr.mxu0 0.0
    %1239 = vmatpush1.msra.mxu0 0.0
    %1240 = vmatprep.subr.mxu0 0.0
    %1241 = vmatpush1.msra.mxu0 0.0
    %1242 = vmatprep.subr.mxu0 0.0
    %1243 = vmatpush1.msra.mxu0 0.0
    %1244 = vmatprep.subr.mxu0 0.0
    %1245 = vmatpush1.msra.mxu0 0.0
    %1246 = vmatprep.subr.mxu0 0.0
    %1247 = vmatpush1.msra.mxu0 0.0
    %1248 = vmatprep.subr.mxu0 0.0
    %1249 = vmatpush1.msra.mxu0 0.0
    %1250 = vmatprep.subr.mxu0 0.0
    %1251 = vmatpush1.msra.mxu0 0.0
    %1252 = vmatprep.subr.mxu0 0.0
    %1253 = vmatpush1.msra.mxu0 0.0
    %1254 = vmatprep.subr.mxu0 0.0
    %1255 = vmatpush1.msra.mxu0 0.0
    %1256 = vmatprep.subr.mxu0 0.0
    %1257 = vmatpush1.msra.mxu0 0.0
    %1258 = vmatprep.subr.mxu0 0.0
    %1259 = vmatpush1.msra.mxu0 0.0
    %1260 = vmatprep.subr.mxu0 0.0
    %1261 = vmatpush1.msra.mxu0 0.0
    %1262 = vmatprep.subr.mxu0 0.0
    %1263 = vmatpush1.msra.mxu0 0.0
    %1264 = vmatprep.subr.mxu0 0.0
    %1265 = vmatpush1.msra.mxu0 0.0
    %1266 = vmatprep.subr.mxu0 0.0
    %1267 = vmatpush1.msra.mxu0 0.0
    %1268 = vmatprep.subr.mxu0 0.0
    %1269 = vmatpush1.msra.mxu0 0.0
    %1270 = vmatprep.subr.mxu0 0.0
    %1271 = vmatpush1.msra.mxu0 0.0
    %1272 = vmatprep.subr.mxu0 0.0
    %1273 = vmatpush1.msra.mxu0 0.0
    %1274 = vmatprep.subr.mxu0 0.0
    %1275 = vmatpush1.msra.mxu0 0.0
    %1276 = vmatprep.subr.mxu0 0.0
    %1277 = vmatpush1.msra.mxu0 0.0
    %1278 = vmatprep.subr.mxu0 0.0
    %1279 = vmatpush1.msra.mxu0 0.0
    %1280 = vmatprep.subr.mxu0 0.0
    %1281 = vmatpush1.msra.mxu0 0.0
    %1282 = vmatprep.mubr.f32.mxu0 0.0
    %1283 = vmatmul.mubr.f32.gmra.mrb[0].mxu0 %v1216
    %v1284 = vpop.f32.mrb[0].mxu0
    %v1285 = vadd.f32 0.0, %v1284
    %v1286 = vpop.f32.mrb[0].mxu0
    %1287 = vdwg.mxu0
    %v1289 = vsel %vm380, %v1060, 0
    %1291 = vmatprep.subr.mxu0 0.0
    %1292 = vmatpush1.msra.mxu0 %v365
    %1293 = vmatprep.subr.mxu0 0.0
    %1294 = vmatpush1.msra.mxu0 0.0
    %1295 = vmatprep.subr.mxu0 0.0
    %1296 = vmatpush1.msra.mxu0 0.0
    %1297 = vmatprep.subr.mxu0 0.0
    %1298 = vmatpush1.msra.mxu0 0.0
    %1299 = vmatprep.subr.mxu0 0.0
    %1300 = vmatpush1.msra.mxu0 0.0
    %1301 = vmatprep.subr.mxu0 0.0
    %1302 = vmatpush1.msra.mxu0 0.0
    %1303 = vmatprep.subr.mxu0 0.0
    %1304 = vmatpush1.msra.mxu0 0.0
    %1305 = vmatprep.subr.mxu0 0.0
    %1306 = vmatpush1.msra.mxu0 0.0
    %1307 = vmatprep.subr.mxu0 0.0
    %1308 = vmatpush1.msra.mxu0 0.0
    %1309 = vmatprep.subr.mxu0 0.0
    %1310 = vmatpush1.msra.mxu0 0.0
    %1311 = vmatprep.subr.mxu0 0.0
    %1312 = vmatpush1.msra.mxu0 0.0
    %1313 = vmatprep.subr.mxu0 0.0
    %1314 = vmatpush1.msra.mxu0 0.0
    %1315 = vmatprep.subr.mxu0 0.0
    %1316 = vmatpush1.msra.mxu0 0.0
    %1317 = vmatprep.subr.mxu0 0.0
    %1318 = vmatpush1.msra.mxu0 0.0
    %1319 = vmatprep.subr.mxu0 0.0
    %1320 = vmatpush1.msra.mxu0 0.0
    %1321 = vmatprep.subr.mxu0 0.0
    %1322 = vmatpush1.msra.mxu0 0.0
    %1323 = vmatprep.subr.mxu0 0.0
    %1324 = vmatpush1.msra.mxu0 0.0
    %1325 = vmatprep.subr.mxu0 0.0
    %1326 = vmatpush1.msra.mxu0 0.0
    %1327 = vmatprep.subr.mxu0 0.0
    %1328 = vmatpush1.msra.mxu0 0.0
    %1329 = vmatprep.subr.mxu0 0.0
    %1330 = vmatpush1.msra.mxu0 0.0
    %1331 = vmatprep.subr.mxu0 0.0
    %1332 = vmatpush1.msra.mxu0 0.0
    %1333 = vmatprep.subr.mxu0 0.0
    %1334 = vmatpush1.msra.mxu0 0.0
    %1335 = vmatprep.subr.mxu0 0.0
    %1336 = vmatpush1.msra.mxu0 0.0
    %1337 = vmatprep.subr.mxu0 0.0
    %1338 = vmatpush1.msra.mxu0 0.0
    %1339 = vmatprep.subr.mxu0 0.0
    %1340 = vmatpush1.msra.mxu0 0.0
    %1341 = vmatprep.subr.mxu0 0.0
    %1342 = vmatpush1.msra.mxu0 0.0
    %1343 = vmatprep.subr.mxu0 0.0
    %1344 = vmatpush1.msra.mxu0 0.0
    %1345 = vmatprep.subr.mxu0 0.0
    %1346 = vmatpush1.msra.mxu0 0.0
    %1347 = vmatprep.subr.mxu0 0.0
    %1348 = vmatpush1.msra.mxu0 0.0
    %1349 = vmatprep.subr.mxu0 0.0
    %1350 = vmatpush1.msra.mxu0 0.0
    %1351 = vmatprep.subr.mxu0 0.0
    %1352 = vmatpush1.msra.mxu0 0.0
    %1353 = vmatprep.subr.mxu0 0.0
    %1354 = vmatpush1.msra.mxu0 0.0
    %1355 = vmatprep.mubr.f32.mxu0 0.0
    %1356 = vmatmul.mubr.f32.gmra.mrb[0].mxu0 %v1289
    %v1357 = vpop.f32.mrb[0].mxu0
    %v1358 = vadd.f32 0.0, %v1357
    %v1359 = vpop.f32.mrb[0].mxu0
    %1360 = vdwg.mxu0
    %v1362 = vsel %vm380, %v1062, 0
    %1364 = vmatprep.subr.mxu0 0.0
    %1365 = vmatpush1.msra.mxu0 %v369
    %1366 = vmatprep.subr.mxu0 0.0
    %1367 = vmatpush1.msra.mxu0 0.0
    %1368 = vmatprep.subr.mxu0 0.0
    %1369 = vmatpush1.msra.mxu0 0.0
    %1370 = vmatprep.subr.mxu0 0.0
    %1371 = vmatpush1.msra.mxu0 0.0
    %1372 = vmatprep.subr.mxu0 0.0
    %1373 = vmatpush1.msra.mxu0 0.0
    %1374 = vmatprep.subr.mxu0 0.0
    %1375 = vmatpush1.msra.mxu0 0.0
    %1376 = vmatprep.subr.mxu0 0.0
    %1377 = vmatpush1.msra.mxu0 0.0
    %1378 = vmatprep.subr.mxu0 0.0
    %1379 = vmatpush1.msra.mxu0 0.0
    %1380 = vmatprep.subr.mxu0 0.0
    %1381 = vmatpush1.msra.mxu0 0.0
    %1382 = vmatprep.subr.mxu0 0.0
    %1383 = vmatpush1.msra.mxu0 0.0
    %1384 = vmatprep.subr.mxu0 0.0
    %1385 = vmatpush1.msra.mxu0 0.0
    %1386 = vmatprep.subr.mxu0 0.0
    %1387 = vmatpush1.msra.mxu0 0.0
    %1388 = vmatprep.subr.mxu0 0.0
    %1389 = vmatpush1.msra.mxu0 0.0
    %1390 = vmatprep.subr.mxu0 0.0
    %1391 = vmatpush1.msra.mxu0 0.0
    %1392 = vmatprep.subr.mxu0 0.0
    %1393 = vmatpush1.msra.mxu0 0.0
    %1394 = vmatprep.subr.mxu0 0.0
    %1395 = vmatpush1.msra.mxu0 0.0
    %1396 = vmatprep.subr.mxu0 0.0
    %1397 = vmatpush1.msra.mxu0 0.0
    %1398 = vmatprep.subr.mxu0 0.0
    %1399 = vmatpush1.msra.mxu0 0.0
    %1400 = vmatprep.subr.mxu0 0.0
    %1401 = vmatpush1.msra.mxu0 0.0
    %1402 = vmatprep.subr.mxu0 0.0
    %1403 = vmatpush1.msra.mxu0 0.0
    %1404 = vmatprep.subr.mxu0 0.0
    %1405 = vmatpush1.msra.mxu0 0.0
    %1406 = vmatprep.subr.mxu0 0.0
    %1407 = vmatpush1.msra.mxu0 0.0
    %1408 = vmatprep.subr.mxu0 0.0
    %1409 = vmatpush1.msra.mxu0 0.0
    %1410 = vmatprep.subr.mxu0 0.0
    %1411 = vmatpush1.msra.mxu0 0.0
    %1412 = vmatprep.subr.mxu0 0.0
    %1413 = vmatpush1.msra.mxu0 0.0
    %1414 = vmatprep.subr.mxu0 0.0
    %1415 = vmatpush1.msra.mxu0 0.0
    %1416 = vmatprep.subr.mxu0 0.0
    %1417 = vmatpush1.msra.mxu0 0.0
    %1418 = vmatprep.subr.mxu0 0.0
    %1419 = vmatpush1.msra.mxu0 0.0
    %1420 = vmatprep.subr.mxu0 0.0
    %1421 = vmatpush1.msra.mxu0 0.0
    %1422 = vmatprep.subr.mxu0 0.0
    %1423 = vmatpush1.msra.mxu0 0.0
    %1424 = vmatprep.subr.mxu0 0.0
    %1425 = vmatpush1.msra.mxu0 0.0
    %1426 = vmatprep.subr.mxu0 0.0
    %1427 = vmatpush1.msra.mxu0 0.0
    %1428 = vmatprep.mubr.f32.mxu0 0.0
    %1429 = vmatmul.mubr.f32.gmra.mrb[0].mxu0 %v1362
    %v1430 = vpop.f32.mrb[0].mxu0
    %v1431 = vadd.f32 0.0, %v1430
    %v1432 = vpop.f32.mrb[0].mxu0
    %1433 = vdwg.mxu0
    %v1435 = vsel %vm380, %v1064, 0
    %1437 = vmatprep.subr.mxu0 0.0
    %1438 = vmatpush1.msra.mxu0 %v371
    %1439 = vmatprep.subr.mxu0 0.0
    %1440 = vmatpush1.msra.mxu0 0.0
    %1441 = vmatprep.subr.mxu0 0.0
    %1442 = vmatpush1.msra.mxu0 0.0
    %1443 = vmatprep.subr.mxu0 0.0
    %1444 = vmatpush1.msra.mxu0 0.0
    %1445 = vmatprep.subr.mxu0 0.0
    %1446 = vmatpush1.msra.mxu0 0.0
    %1447 = vmatprep.subr.mxu0 0.0
    %1448 = vmatpush1.msra.mxu0 0.0
    %1449 = vmatprep.subr.mxu0 0.0
    %1450 = vmatpush1.msra.mxu0 0.0
    %1451 = vmatprep.subr.mxu0 0.0
    %1452 = vmatpush1.msra.mxu0 0.0
    %1453 = vmatprep.subr.mxu0 0.0
    %1454 = vmatpush1.msra.mxu0 0.0
    %1455 = vmatprep.subr.mxu0 0.0
    %1456 = vmatpush1.msra.mxu0 0.0
    %1457 = vmatprep.subr.mxu0 0.0
    %1458 = vmatpush1.msra.mxu0 0.0
    %1459 = vmatprep.subr.mxu0 0.0
    %1460 = vmatpush1.msra.mxu0 0.0
    %1461 = vmatprep.subr.mxu0 0.0
    %1462 = vmatpush1.msra.mxu0 0.0
    %1463 = vmatprep.subr.mxu0 0.0
    %1464 = vmatpush1.msra.mxu0 0.0
    %1465 = vmatprep.subr.mxu0 0.0
    %1466 = vmatpush1.msra.mxu0 0.0
    %1467 = vmatprep.subr.mxu0 0.0
    %1468 = vmatpush1.msra.mxu0 0.0
    %1469 = vmatprep.subr.mxu0 0.0
    %1470 = vmatpush1.msra.mxu0 0.0
    %1471 = vmatprep.subr.mxu0 0.0
    %1472 = vmatpush1.msra.mxu0 0.0
    %1473 = vmatprep.subr.mxu0 0.0
    %1474 = vmatpush1.msra.mxu0 0.0
    %1475 = vmatprep.subr.mxu0 0.0
    %1476 = vmatpush1.msra.mxu0 0.0
    %1477 = vmatprep.subr.mxu0 0.0
    %1478 = vmatpush1.msra.mxu0 0.0
    %1479 = vmatprep.subr.mxu0 0.0
    %1480 = vmatpush1.msra.mxu0 0.0
    %1481 = vmatprep.subr.mxu0 0.0
    %1482 = vmatpush1.msra.mxu0 0.0
    %1483 = vmatprep.subr.mxu0 0.0
    %1484 = vmatpush1.msra.mxu0 0.0
    %1485 = vmatprep.subr.mxu0 0.0
    %1486 = vmatpush1.msra.mxu0 0.0
    %1487 = vmatprep.subr.mxu0 0.0
    %1488 = vmatpush1.msra.mxu0 0.0
    %1489 = vmatprep.subr.mxu0 0.0
    %1490 = vmatpush1.msra.mxu0 0.0
    %1491 = vmatprep.subr.mxu0 0.0
    %1492 = vmatpush1.msra.mxu0 0.0
    %1493 = vmatprep.subr.mxu0 0.0
    %1494 = vmatpush1.msra.mxu0 0.0
    %1495 = vmatprep.subr.mxu0 0.0
    %1496 = vmatpush1.msra.mxu0 0.0
    %1497 = vmatprep.subr.mxu0 0.0
    %1498 = vmatpush1.msra.mxu0 0.0
    %1499 = vmatprep.subr.mxu0 0.0
    %1500 = vmatpush1.msra.mxu0 0.0
    %1501 = vmatprep.mubr.f32.mxu0 0.0
    %1502 = vmatmul.mubr.f32.gmra.mrb[0].mxu0 %v1435
    %v1503 = vpop.f32.mrb[0].mxu0
    %v1504 = vadd.f32 0.0, %v1503
    %v1505 = vpop.f32.mrb[0].mxu0
    %1506 = vdwg.mxu0
    %v1508 = vsel %vm380, %v1066, 0
    %1510 = vmatprep.subr.mxu0 0.0
    %1511 = vmatpush1.msra.mxu0 %v375
    %1512 = vmatprep.subr.mxu0 0.0
    %1513 = vmatpush1.msra.mxu0 0.0
    %1514 = vmatprep.subr.mxu0 0.0
    %1515 = vmatpush1.msra.mxu0 0.0
    %1516 = vmatprep.subr.mxu0 0.0
    %1517 = vmatpush1.msra.mxu0 0.0
    %1518 = vmatprep.subr.mxu0 0.0
    %1519 = vmatpush1.msra.mxu0 0.0
    %1520 = vmatprep.subr.mxu0 0.0
    %1521 = vmatpush1.msra.mxu0 0.0
    %1522 = vmatprep.subr.mxu0 0.0
    %1523 = vmatpush1.msra.mxu0 0.0
    %1524 = vmatprep.subr.mxu0 0.0
    %1525 = vmatpush1.msra.mxu0 0.0
    %1526 = vmatprep.subr.mxu0 0.0
    %1527 = vmatpush1.msra.mxu0 0.0
    %1528 = vmatprep.subr.mxu0 0.0
    %1529 = vmatpush1.msra.mxu0 0.0
    %1530 = vmatprep.subr.mxu0 0.0
    %1531 = vmatpush1.msra.mxu0 0.0
    %1532 = vmatprep.subr.mxu0 0.0
    %1533 = vmatpush1.msra.mxu0 0.0
    %1534 = vmatprep.subr.mxu0 0.0
    %1535 = vmatpush1.msra.mxu0 0.0
    %1536 = vmatprep.subr.mxu0 0.0
    %1537 = vmatpush1.msra.mxu0 0.0
    %1538 = vmatprep.subr.mxu0 0.0
    %1539 = vmatpush1.msra.mxu0 0.0
    %1540 = vmatprep.subr.mxu0 0.0
    %1541 = vmatpush1.msra.mxu0 0.0
    %1542 = vmatprep.subr.mxu0 0.0
    %1543 = vmatpush1.msra.mxu0 0.0
    %1544 = vmatprep.subr.mxu0 0.0
    %1545 = vmatpush1.msra.mxu0 0.0
    %1546 = vmatprep.subr.mxu0 0.0
    %1547 = vmatpush1.msra.mxu0 0.0
    %1548 = vmatprep.subr.mxu0 0.0
    %1549 = vmatpush1.msra.mxu0 0.0
    %1550 = vmatprep.subr.mxu0 0.0
    %1551 = vmatpush1.msra.mxu0 0.0
    %1552 = vmatprep.subr.mxu0 0.0
    %1553 = vmatpush1.msra.mxu0 0.0
    %1554 = vmatprep.subr.mxu0 0.0
    %1555 = vmatpush1.msra.mxu0 0.0
    %1556 = vmatprep.subr.mxu0 0.0
    %1557 = vmatpush1.msra.mxu0 0.0
    %1558 = vmatprep.subr.mxu0 0.0
    %1559 = vmatpush1.msra.mxu0 0.0
    %1560 = vmatprep.subr.mxu0 0.0
    %1561 = vmatpush1.msra.mxu0 0.0
    %1562 = vmatprep.subr.mxu0 0.0
    %1563 = vmatpush1.msra.mxu0 0.0
    %1564 = vmatprep.subr.mxu0 0.0
    %1565 = vmatpush1.msra.mxu0 0.0
    %1566 = vmatprep.subr.mxu0 0.0
    %1567 = vmatpush1.msra.mxu0 0.0
    %1568 = vmatprep.subr.mxu0 0.0
    %1569 = vmatpush1.msra.mxu0 0.0
    %1570 = vmatprep.subr.mxu0 0.0
    %1571 = vmatpush1.msra.mxu0 0.0
    %1572 = vmatprep.subr.mxu0 0.0
    %1573 = vmatpush1.msra.mxu0 0.0
    %1574 = vmatprep.mubr.f32.mxu0 0.0
    %1575 = vmatmul.mubr.f32.gmra.mrb[0].mxu0 %v1508
    %v1576 = vpop.f32.mrb[0].mxu0
    %v1577 = vadd.f32 0.0, %v1576
    %v1578 = vpop.f32.mrb[0].mxu0
    %1579 = vdwg.mxu0
    %v1581 = vsel %vm380, %v1068, 0
    %1583 = vmatprep.subr.mxu0 0.0
    %1584 = vmatpush1.msra.mxu0 %v377
    %1585 = vmatprep.subr.mxu0 0.0
    %1586 = vmatpush1.msra.mxu0 0.0
    %1587 = vmatprep.subr.mxu0 0.0
    %1588 = vmatpush1.msra.mxu0 0.0
    %1589 = vmatprep.subr.mxu0 0.0
    %1590 = vmatpush1.msra.mxu0 0.0
    %1591 = vmatprep.subr.mxu0 0.0
    %1592 = vmatpush1.msra.mxu0 0.0
    %1593 = vmatprep.subr.mxu0 0.0
    %1594 = vmatpush1.msra.mxu0 0.0
    %1595 = vmatprep.subr.mxu0 0.0
    %1596 = vmatpush1.msra.mxu0 0.0
    %1597 = vmatprep.subr.mxu0 0.0
    %1598 = vmatpush1.msra.mxu0 0.0
    %1599 = vmatprep.subr.mxu0 0.0
    %1600 = vmatpush1.msra.mxu0 0.0
    %1601 = vmatprep.subr.mxu0 0.0
    %1602 = vmatpush1.msra.mxu0 0.0
    %1603 = vmatprep.subr.mxu0 0.0
    %1604 = vmatpush1.msra.mxu0 0.0
    %1605 = vmatprep.subr.mxu0 0.0
    %1606 = vmatpush1.msra.mxu0 0.0
    %1607 = vmatprep.subr.mxu0 0.0
    %1608 = vmatpush1.msra.mxu0 0.0
    %1609 = vmatprep.subr.mxu0 0.0
    %1610 = vmatpush1.msra.mxu0 0.0
    %1611 = vmatprep.subr.mxu0 0.0
    %1612 = vmatpush1.msra.mxu0 0.0
    %1613 = vmatprep.subr.mxu0 0.0
    %1614 = vmatpush1.msra.mxu0 0.0
    %1615 = vmatprep.subr.mxu0 0.0
    %1616 = vmatpush1.msra.mxu0 0.0
    %1617 = vmatprep.subr.mxu0 0.0
    %1618 = vmatpush1.msra.mxu0 0.0
    %1619 = vmatprep.subr.mxu0 0.0
    %1620 = vmatpush1.msra.mxu0 0.0
    %1621 = vmatprep.subr.mxu0 0.0
    %1622 = vmatpush1.msra.mxu0 0.0
    %1623 = vmatprep.subr.mxu0 0.0
    %1624 = vmatpush1.msra.mxu0 0.0
    %1625 = vmatprep.subr.mxu0 0.0
    %1626 = vmatpush1.msra.mxu0 0.0
    %1627 = vmatprep.subr.mxu0 0.0
    %1628 = vmatpush1.msra.mxu0 0.0
    %1629 = vmatprep.subr.mxu0 0.0
    %1630 = vmatpush1.msra.mxu0 0.0
    %1631 = vmatprep.subr.mxu0 0.0
    %1632 = vmatpush1.msra.mxu0 0.0
    %1633 = vmatprep.subr.mxu0 0.0
    %1634 = vmatpush1.msra.mxu0 0.0
    %1635 = vmatprep.subr.mxu0 0.0
    %1636 = vmatpush1.msra.mxu0 0.0
    %1637 = vmatprep.subr.mxu0 0.0
    %1638 = vmatpush1.msra.mxu0 0.0
    %1639 = vmatprep.subr.mxu0 0.0
    %1640 = vmatpush1.msra.mxu0 0.0
    %1641 = vmatprep.subr.mxu0 0.0
    %1642 = vmatpush1.msra.mxu0 0.0
    %1643 = vmatprep.subr.mxu0 0.0
    %1644 = vmatpush1.msra.mxu0 0.0
    %1645 = vmatprep.subr.mxu0 0.0
    %1646 = vmatpush1.msra.mxu0 0.0
    %1647 = vmatprep.mubr.f32.mxu0 0.0
    %1648 = vmatmul.mubr.f32.gmra.mrb[0].mxu0 %v1581
    %v1649 = vpop.f32.mrb[0].mxu0
    %v1650 = vadd.f32 0.0, %v1649
    %v1651 = vpop.f32.mrb[0].mxu0
    %1652 = vdwg.mxu0
    %1655 = vrot.lane.b32.xlu0 %v1285, 8
    %v1656 = vpop.permute.xlu0 %1655
    %1657 = vrot.lane.b32.xlu0 %v1358, 8
    %v1658 = vpop.permute.xlu0 %1657
    %1663 = vrot.lane.b32.xlu0 %v1431, 16
    %v1664 = vpop.permute.xlu0 %1663
    %1665 = vrot.lane.b32.xlu0 %v1504, 16
    %v1666 = vpop.permute.xlu0 %1665
    %1671 = vrot.lane.b32.xlu0 %v1577, 24
    %v1672 = vpop.permute.xlu0 %1671
    %1673 = vrot.lane.b32.xlu0 %v1650, 24
    %v1674 = vpop.permute.xlu0 %1673
    %v1677 = vsel %vm380, %v1139, %v1656
    %v1678 = vsel %vm380, %v1212, %v1658
    %vm1679 = vcmask 130048
    %v1680 = vsel %vm1679, %v1677, %v1664
    %v1681 = vsel %vm1679, %v1678, %v1666
    %vm1682 = vcmask 195584
    %v1683 = vsel %vm1682, %v1680, %v1672
    %v1684 = vsel %vm1682, %v1681, %v1674
    %s1685 = scalar_lea.vmem [#allocation5], 96
    %v1686 = vld [vmem:[%s1685] sm:$0xff]
    %v1687 = vld [vmem:[%s1685 + $0x8] sm:$0xff]
    %v1688 = vld [vmem:[%s1685 + $0x10] sm:$0xff]
    %v1689 = vld [vmem:[%s1685 + $0x18] sm:$0xff]
    %s1690 = scalar_lea.vmem %s2, 3
    %v1691 = vld [vmem:[%s1690] sm:$0x1]
    %v1693 = vlaneseq
    %v1694 = vshrl.u32 %v1693, 7
    %v1695 = vsub.s32 0, %v1694
    %v1696 = vrot.slane %v1691, %v1695
    %v1699 = vsel %vm56, %v1683, 0
    %v1702 = vsel %vm56, %v1684, 0
    %1704 = vmatprep.subr.mxu0 0.0
    %1705 = vmatpush1.msra.mxu0 %v1686
    %1706 = vmatprep.subr.mxu0 0.0
    %1707 = vmatpush1.msra.mxu0 %v1687
    %1708 = vmatprep.subr.mxu0 0.0
    %1709 = vmatpush1.msra.mxu0 %v1688
    %1710 = vmatprep.subr.mxu0 0.0
    %1711 = vmatpush1.msra.mxu0 %v1689
    %1712 = vmatprep.subr.mxu0 0.0
    %1713 = vmatpush1.msra.mxu0 0.0
    %1714 = vmatprep.subr.mxu0 0.0
    %1715 = vmatpush1.msra.mxu0 0.0
    %1716 = vmatprep.subr.mxu0 0.0
    %1717 = vmatpush1.msra.mxu0 0.0
    %1718 = vmatprep.subr.mxu0 0.0
    %1719 = vmatpush1.msra.mxu0 0.0
    %1720 = vmatprep.subr.mxu0 0.0
    %1721 = vmatpush1.msra.mxu0 0.0
    %1722 = vmatprep.subr.mxu0 0.0
    %1723 = vmatpush1.msra.mxu0 0.0
    %1724 = vmatprep.subr.mxu0 0.0
    %1725 = vmatpush1.msra.mxu0 0.0
    %1726 = vmatprep.subr.mxu0 0.0
    %1727 = vmatpush1.msra.mxu0 0.0
    %1728 = vmatprep.subr.mxu0 0.0
    %1729 = vmatpush1.msra.mxu0 0.0
    %1730 = vmatprep.subr.mxu0 0.0
    %1731 = vmatpush1.msra.mxu0 0.0
    %1732 = vmatprep.subr.mxu0 0.0
    %1733 = vmatpush1.msra.mxu0 0.0
    %1734 = vmatprep.subr.mxu0 0.0
    %1735 = vmatpush1.msra.mxu0 0.0
    %1736 = vmatprep.subr.mxu0 0.0
    %1737 = vmatpush1.msra.mxu0 0.0
    %1738 = vmatprep.subr.mxu0 0.0
    %1739 = vmatpush1.msra.mxu0 0.0
    %1740 = vmatprep.subr.mxu0 0.0
    %1741 = vmatpush1.msra.mxu0 0.0
    %1742 = vmatprep.subr.mxu0 0.0
    %1743 = vmatpush1.msra.mxu0 0.0
    %1744 = vmatprep.subr.mxu0 0.0
    %1745 = vmatpush1.msra.mxu0 0.0
    %1746 = vmatprep.subr.mxu0 0.0
    %1747 = vmatpush1.msra.mxu0 0.0
    %1748 = vmatprep.subr.mxu0 0.0
    %1749 = vmatpush1.msra.mxu0 0.0
    %1750 = vmatprep.subr.mxu0 0.0
    %1751 = vmatpush1.msra.mxu0 0.0
    %1752 = vmatprep.subr.mxu0 0.0
    %1753 = vmatpush1.msra.mxu0 0.0
    %1754 = vmatprep.subr.mxu0 0.0
    %1755 = vmatpush1.msra.mxu0 0.0
    %1756 = vmatprep.subr.mxu0 0.0
    %1757 = vmatpush1.msra.mxu0 0.0
    %1758 = vmatprep.subr.mxu0 0.0
    %1759 = vmatpush1.msra.mxu0 0.0
    %1760 = vmatprep.subr.mxu0 0.0
    %1761 = vmatpush1.msra.mxu0 0.0
    %1762 = vmatprep.subr.mxu0 0.0
    %1763 = vmatpush1.msra.mxu0 0.0
    %1764 = vmatprep.subr.mxu0 0.0
    %1765 = vmatpush1.msra.mxu0 0.0
    %1766 = vmatprep.subr.mxu0 0.0
    %1767 = vmatpush1.msra.mxu0 0.0
    %1768 = vmatprep.mubr.f32.mxu0 0.0
    %1769 = vmatmul.mubr.f32.gmra.mrb[0].mxu0 %v1699
    %v1770 = vpop.f32.mrb[0].mxu0
    %v1771 = vadd.f32 %v1696, %v1770
    %v1772 = vpop.f32.mrb[0].mxu0
    %1773 = vmatprep.mubr.f32.mxu0 0.0
    %1774 = vmatmul.mubr.f32.gmra.mrb[0].mxu0 %v1702
    %v1775 = vpop.f32.mrb[0].mxu0
    %v1776 = vadd.f32 %v1696, %v1775
    %v1777 = vpop.f32.mrb[0].mxu0
    %1778 = vdwg.mxu0
    %v1779 = vxor.u32 %v1771, 2147483648
    %v1780 = vxor.u32 %v1776, 2147483648
    %v1781 = vmul.f32 %v1779, 1.442695
    %v1782 = vpow.pop %v1781
    %v1783 = vmul.f32 %v1780, 1.442695
    %v1784 = vpow.pop %v1783
    %v1785 = vadd.f32 %v1782, 1.0
    %v1786 = vadd.f32 %v1784, 1.0
    %v1787 = vrcp.pop %v1785
    %v1788 = vmul.f32 1.0, %v1787
    %v1789 = vrcp.pop %v1786
    %v1790 = vmul.f32 1.0, %v1789
    %v1791 = vmul.f32 %v1683, %v1788
    %v1792 = vmul.f32 %v1684, %v1790
    %s1793 = scalar_lea.vmem [#allocation5], 128
    %v1794 = vld [vmem:[%s1793] sm:$0xff]
    %v1795 = vld [vmem:[%s1793 + $0x8] sm:$0xff]
    %v1796 = vld [vmem:[%s1793 + $0x10] sm:$0xff]
    %v1797 = vld [vmem:[%s1793 + $0x18] sm:$0xff]
    %s1798 = scalar_lea.vmem %s2, 4
    %v1799 = vld [vmem:[%s1798] sm:$0x1]
    %v1801 = vlaneseq
    %v1802 = vshrl.u32 %v1801, 7
    %v1803 = vsub.s32 0, %v1802
    %v1804 = vrot.slane %v1799, %v1803
    %v1807 = vsel %vm56, %v1791, 0
    %v1810 = vsel %vm56, %v1792, 0
    %1812 = vmatprep.subr.mxu0 0.0
    %1813 = vmatpush1.msra.mxu0 %v1794
    %1814 = vmatprep.subr.mxu0 0.0
    %1815 = vmatpush1.msra.mxu0 %v1795
    %1816 = vmatprep.subr.mxu0 0.0
    %1817 = vmatpush1.msra.mxu0 %v1796
    %1818 = vmatprep.subr.mxu0 0.0
    %1819 = vmatpush1.msra.mxu0 %v1797
    %1820 = vmatprep.subr.mxu0 0.0
    %1821 = vmatpush1.msra.mxu0 0.0
    %1822 = vmatprep.subr.mxu0 0.0
    %1823 = vmatpush1.msra.mxu0 0.0
    %1824 = vmatprep.subr.mxu0 0.0
    %1825 = vmatpush1.msra.mxu0 0.0
    %1826 = vmatprep.subr.mxu0 0.0
    %1827 = vmatpush1.msra.mxu0 0.0
    %1828 = vmatprep.subr.mxu0 0.0
    %1829 = vmatpush1.msra.mxu0 0.0
    %1830 = vmatprep.subr.mxu0 0.0
    %1831 = vmatpush1.msra.mxu0 0.0
    %1832 = vmatprep.subr.mxu0 0.0
    %1833 = vmatpush1.msra.mxu0 0.0
    %1834 = vmatprep.subr.mxu0 0.0
    %1835 = vmatpush1.msra.mxu0 0.0
    %1836 = vmatprep.subr.mxu0 0.0
    %1837 = vmatpush1.msra.mxu0 0.0
    %1838 = vmatprep.subr.mxu0 0.0
    %1839 = vmatpush1.msra.mxu0 0.0
    %1840 = vmatprep.subr.mxu0 0.0
    %1841 = vmatpush1.msra.mxu0 0.0
    %1842 = vmatprep.subr.mxu0 0.0
    %1843 = vmatpush1.msra.mxu0 0.0
    %1844 = vmatprep.subr.mxu0 0.0
    %1845 = vmatpush1.msra.mxu0 0.0
    %1846 = vmatprep.subr.mxu0 0.0
    %1847 = vmatpush1.msra.mxu0 0.0
    %1848 = vmatprep.subr.mxu0 0.0
    %1849 = vmatpush1.msra.mxu0 0.0
    %1850 = vmatprep.subr.mxu0 0.0
    %1851 = vmatpush1.msra.mxu0 0.0
    %1852 = vmatprep.subr.mxu0 0.0
    %1853 = vmatpush1.msra.mxu0 0.0
    %1854 = vmatprep.subr.mxu0 0.0
    %1855 = vmatpush1.msra.mxu0 0.0
    %1856 = vmatprep.subr.mxu0 0.0
    %1857 = vmatpush1.msra.mxu0 0.0
    %1858 = vmatprep.subr.mxu0 0.0
    %1859 = vmatpush1.msra.mxu0 0.0
    %1860 = vmatprep.subr.mxu0 0.0
    %1861 = vmatpush1.msra.mxu0 0.0
    %1862 = vmatprep.subr.mxu0 0.0
    %1863 = vmatpush1.msra.mxu0 0.0
    %1864 = vmatprep.subr.mxu0 0.0
    %1865 = vmatpush1.msra.mxu0 0.0
    %1866 = vmatprep.subr.mxu0 0.0
    %1867 = vmatpush1.msra.mxu0 0.0
    %1868 = vmatprep.subr.mxu0 0.0
    %1869 = vmatpush1.msra.mxu0 0.0
    %1870 = vmatprep.subr.mxu0 0.0
    %1871 = vmatpush1.msra.mxu0 0.0
    %1872 = vmatprep.subr.mxu0 0.0
    %1873 = vmatpush1.msra.mxu0 0.0
    %1874 = vmatprep.subr.mxu0 0.0
    %1875 = vmatpush1.msra.mxu0 0.0
    %1876 = vmatprep.mubr.f32.mxu0 0.0
    %1877 = vmatmul.mubr.f32.gmra.mrb[0].mxu0 %v1807
    %v1878 = vpop.f32.mrb[0].mxu0
    %v1879 = vadd.f32 %v1804, %v1878
    %v1880 = vpop.f32.mrb[0].mxu0
    %1881 = vmatprep.mubr.f32.mxu0 0.0
    %1882 = vmatmul.mubr.f32.gmra.mrb[0].mxu0 %v1810
    %v1883 = vpop.f32.mrb[0].mxu0
    %v1884 = vadd.f32 %v1804, %v1883
    %v1885 = vpop.f32.mrb[0].mxu0
    %1886 = vdwg.mxu0
    %1887 = vst.msk [vmem:[#allocation7] sm:$0xff] %vm56, %v1879
    %1888 = vst.msk [vmem:[#allocation7 + $0x8] sm:$0xff] %vm56, %v1884
    // Predicated region
    $region22: #{tpu_custom_call.1} parent=1 // pred_check
      _
    $region23: #{tpu_custom_call.1} parent=1 // pred_check_branch
      %1890 = sbr.rel (0) target = $region25
    $region24: #{tpu_custom_call.1} parent=1 // pred_region
      %s1892 = ssub.s32 256, 256
      %1893 = vsyncadd [#allocation4], %s1892
      %s1894 = sshll.u32 [#allocation7], 4
      %s1895 = int_to_ptr.vmem [resolvable:$true] %s1894
      %1900 = dma.vmem_to_hbm [thread:$0]  %s1895, 256, %s3, [#allocation4], 128, 128, 8
    $region25: #{tpu_custom_call.1} parent=1 // pred_fallthru
      _
    // Predicated region
    $region26: #{tpu_custom_call.1} parent=1 // pred_check
      _
    $region27: #{tpu_custom_call.1} parent=1 // pred_check_branch
      %1902 = sbr.rel (0) target = $region29
    $region28: #{tpu_custom_call.1} parent=1 // pred_region
      %1903 = dma.done [#allocation4], 256
    $region29: #{tpu_custom_call.1} parent=1 // pred_fallthru
      _
    %1904 = vsyncpa [#allocation3], 1
    %1905 = vsyncpa [#allocation6], 1
    %1906 = vsyncpa [#allocation4], 1

</llo_original>
